<compile_context>
chip_gen: v7x
topology: tpu7x:2x2x1
jax: 0.10.0
libtpu: 0.0.40
codegen_flags: <defaults>
</compile_context>

<pallas_src>
import functools
import math

import jax
import jax.numpy as jnp
from jax.experimental import pallas as pl
from jax.experimental.pallas import tpu as pltpu


def _round_up(v, m):
    return ((v + m - 1) // m) * m


# ----------------------------- fused stack kernel -----------------------------
def _lstm_stack_kernel(x_ref, w_ih_ref, w_hh_ref, b_ref, out_ref, gates_scr,
                       *, seq_len, batch, hidden, unroll):
    """Grid axis 0 = layer (sequential). One grid step runs one full LSTM layer.

    x_ref    : (T*B, Rin)   padded input sequence (layer-0 input), compute dtype
    w_ih_ref : (1, Rin, Wg) this layer's input->gates weight (rows >= in-dim are 0)
    w_hh_ref : (1, H, Wg)   this layer's hidden->gates weight
    b_ref    : (1, 1, Wg)   this layer's bias (b_ih + b_hh), f32
    out_ref  : (T*B, H)     layer output sequence; VMEM-resident across layers
    gates_scr: (T*B, Wg)    per-layer input-gate preactivations, f32
    Gate lane layout (PyTorch order): [i | f | g | o], stride H, tail lanes zero.
    """
    layer = pl.program_id(0)
    H = hidden
    w_dtype = w_hh_ref.dtype

    # ---- bulk input->gates projection for this layer (one big MXU matmul) ----
    @pl.when(layer == 0)
    def _():
        gates_scr[...] = (
            jnp.dot(x_ref[...], w_ih_ref[0],
                    preferred_element_type=jnp.float32) + b_ref[0])

    @pl.when(layer > 0)
    def _():
        prev = out_ref[...].astype(w_dtype)                        # (T*B, H)
        gates_scr[...] = (
            jnp.dot(prev, w_ih_ref[0, :H, :],
                    preferred_element_type=jnp.float32) + b_ref[0])

    # ---- sequential recurrence: only h @ W_hh + elementwise per step ----
    w_hh = w_hh_ref[0]                                             # (H, Wg)

    def step(t, carry):
        h, c = carry                                               # (B, H) f32 vregs
        off = pl.multiple_of(t * batch, 8)
        gates = (gates_scr[pl.ds(off, batch), :]
                 + jnp.dot(h.astype(w_dtype), w_hh,
                           preferred_element_type=jnp.float32))    # (B, Wg) f32
        i = jax.nn.sigmoid(gates[:, 0 * H:1 * H])
        f = jax.nn.sigmoid(gates[:, 1 * H:2 * H])
        g = jnp.tanh(gates[:, 2 * H:3 * H])
        o = jax.nn.sigmoid(gates[:, 3 * H:4 * H])
        c_new = f * c + i * g
        h_new = o * jnp.tanh(c_new)
        out_ref[pl.ds(off, batch), :] = h_new.astype(out_ref.dtype)
        return (h_new, c_new)

    zero = jnp.zeros((batch, H), jnp.float32)
    jax.lax.fori_loop(0, seq_len, step, (zero, zero), unroll=unroll)


def _lstm_stack_pallas(x, w_ih, w_hh, b, *, seq_len):
    """x: (T*B, Rin) compute dtype; w_ih: (L, Rin, Wg); w_hh: (L, H, Wg);
    b: (L, 1, Wg) f32.  Returns (T*B, H) in the compute dtype."""
    TB, Rin = x.shape
    L, H, Wg = w_hh.shape
    cdt = w_hh.dtype
    batch = TB // seq_len
    unroll = True if seq_len <= 16 else 8

    # VMEM budget from actual buffer sizes (double-buffered blocks counted x2),
    # with headroom; floor at the default 32 MiB scoped limit.  Never hardcode
    # the full physical VMEM (64 MiB on v7x).
    itemsize = jnp.dtype(cdt).itemsize
    needed = (2 * TB * Rin * itemsize          # x block
              + 2 * Rin * Wg * itemsize        # w_ih block
              + 2 * H * Wg * itemsize          # w_hh block
              + 2 * Wg * 4                     # bias block
              + 2 * TB * H * itemsize          # out block
              + TB * Wg * 4)                   # gates_scr (f32)
    vmem_limit = max(int(needed * 1.25) + (1 << 20), 32 * 1024 * 1024)

    kernel = functools.partial(_lstm_stack_kernel, seq_len=seq_len, batch=batch,
                               hidden=H, unroll=unroll)
    return pl.pallas_call(
        kernel,
        out_shape=jax.ShapeDtypeStruct((TB, H), cdt),
        grid_spec=pltpu.PrefetchScalarGridSpec(
            num_scalar_prefetch=0,
            grid=(L,),
            in_specs=[
                pl.BlockSpec((TB, Rin), lambda l: (0, 0)),        # resident input
                pl.BlockSpec((1, Rin, Wg), lambda l: (l, 0, 0)),  # streamed per layer
                pl.BlockSpec((1, H, Wg), lambda l: (l, 0, 0)),
                pl.BlockSpec((1, 1, Wg), lambda l: (l, 0, 0)),
            ],
            out_specs=pl.BlockSpec((TB, H), lambda l: (0, 0)),    # resident across layers
            scratch_shapes=[pltpu.VMEM((TB, Wg), jnp.float32)],
        ),
        compiler_params=pltpu.CompilerParams(
            dimension_semantics=("arbitrary",),   # layer axis carries state via out_ref
            vmem_limit_bytes=vmem_limit,
        ),
    )(x, w_ih, w_hh, b)


# ------------------------------ parameter handling -----------------------------
def init_lstmar_master_params(key, dim_encoded, dim_output, num_layers):
    """PyTorch-layout params: list of (w_ih (4H,Din), w_hh (4H,H), b_ih, b_hh),
    gate order [i, f, g, o], uniform(-1/sqrt(H), 1/sqrt(H)) like nn.LSTM."""
    total = num_layers + (num_layers - 1) * num_layers
    k = 1.0 / math.sqrt(dim_output)
    params = []
    d_in = dim_encoded
    for _ in range(total):
        key, k1, k2, k3, k4 = jax.random.split(key, 5)
        w_ih = jax.random.uniform(k1, (4 * dim_output, d_in), jnp.float32, -k, k)
        w_hh = jax.random.uniform(k2, (4 * dim_output, dim_output), jnp.float32, -k, k)
        b_ih = jax.random.uniform(k3, (4 * dim_output,), jnp.float32, -k, k)
        b_hh = jax.random.uniform(k4, (4 * dim_output,), jnp.float32, -k, k)
        params.append((w_ih, w_hh, b_ih, b_hh))
        d_in = dim_output
    return params


def pack_lstmar_params(master, dim_encoded, dim_output, compute_dtype=jnp.bfloat16):
    """Pack PyTorch-layout params into the kernel layout:
       transposed, gate order kept (i,f,g,o), tight gate stride H,
       total gate width padded to a 128 multiple, W_ih rows padded to a common
       height shared by the encoded and hidden dims, weights in compute dtype."""
    H = dim_output
    Wg = _round_up(4 * H, 128)                      # packed gate width (lanes)
    Rin = _round_up(max(dim_encoded, H), 128)       # shared W_ih row height

    def pack_w_ih(w):                               # (4H, Din) -> (Rin, Wg)
        d_in = w.shape[1]
        out = jnp.zeros((Rin, Wg), jnp.float32)
        return out.at[:d_in, :4 * H].set(w.T)

    def pack_w_hh(w):                               # (4H, H) -> (H, Wg)
        out = jnp.zeros((H, Wg), jnp.float32)
        return out.at[:, :4 * H].set(w.T)

    def pack_b(b_ih, b_hh):                         # -> (Wg,), padded lanes zero
        out = jnp.zeros((Wg,), jnp.float32)
        return out.at[:4 * H].set(b_ih + b_hh)

    return {
        "w_ih": jnp.stack([pack_w_ih(m[0]) for m in master]).astype(compute_dtype),
        "w_hh": jnp.stack([pack_w_hh(m[1]) for m in master]).astype(compute_dtype),
        "b": jnp.stack([pack_b(m[2], m[3]) for m in master])[:, None, :],  # (L,1,Wg) f32
        "dim_output": H,
        "dim_encoded": dim_encoded,
    }


# ----------------------------------- forward -----------------------------------
def lstmar_forward(x, p):
    """LSTMAR.forward. x: (N, K, num_blocks, dimEncoded) f32 -> (N, K, num_blocks, dimOutput)."""
    N, K, T, D = x.shape
    H = p["dim_output"]
    w_ih, w_hh, b = p["w_ih"], p["w_hh"], p["b"]
    cdt = w_hh.dtype
    Rin = w_ih.shape[1]
    B = N * K
    Bp = _round_up(max(B, 8), 8)

    # (N,K,T,D) -> (B,T,D) -> time-major (T,B,D); pad batch to sublanes and the
    # feature dim to the packed weight row height; cast to the compute dtype.
    xt = jnp.transpose(x.reshape(B, T, D), (1, 0, 2))
    xt = jnp.pad(xt, ((0, 0), (0, Bp - B), (0, Rin - D))).astype(cdt)

    out = _lstm_stack_pallas(xt.reshape(T * Bp, Rin), w_ih, w_hh, b, seq_len=T)

    out = out.reshape(T, Bp, H)[:, :B, :].astype(jnp.float32)
    return jnp.transpose(out, (1, 0, 2)).reshape(N, K, T, H)


# ----------------------- pure-JAX reference (for checking) -----------------------
def _lstm_layer_ref(x_tbd, w_ih, w_hh, b_ih, b_hh):
    H = w_hh.shape[1]
    w_ih_t, w_hh_t = w_ih.T, w_hh.T
    b = (b_ih + b_hh)[None, :]

    def step(carry, x_t):
        h, c = carry
        gates = x_t @ w_ih_t + h @ w_hh_t + b
        i = jax.nn.sigmoid(gates[:, 0 * H:1 * H])
        f = jax.nn.sigmoid(gates[:, 1 * H:2 * H])
        g = jnp.tanh(gates[:, 2 * H:3 * H])
        o = jax.nn.sigmoid(gates[:, 3 * H:4 * H])
        c = f * c + i * g
        h = o * jnp.tanh(c)
        return (h, c), h

    B = x_tbd.shape[1]
    init = (jnp.zeros((B, H), jnp.float32), jnp.zeros((B, H), jnp.float32))
    _, hs = jax.lax.scan(step, init, x_tbd)
    return hs


def lstmar_forward_ref(x, master):
    N, K, T, D = x.shape
    B = N * K
    h = jnp.transpose(x.reshape(B, T, D), (1, 0, 2))
    for (w_ih, w_hh, b_ih, b_hh) in master:
        h = _lstm_layer_ref(h, w_ih, w_hh, b_ih, b_hh)
    return jnp.transpose(h, (1, 0, 2)).reshape(N, K, T, -1)


if __name__ == "__main__":
    # Small shapes consistent with the module's forward.
    N, K, num_blocks = 2, 2, 8
    dim_encoded, dim_output, num_layers = 16, 32, 2

    key = jax.random.PRNGKey(0)
    key, kx, kp = jax.random.split(key, 3)
    x = jax.random.normal(kx, (N, K, num_blocks, dim_encoded), jnp.float32)
    master = init_lstmar_master_params(kp, dim_encoded, dim_output, num_layers)

    ref = jax.block_until_ready(lstmar_forward_ref(x, master))

    # 1) f32-weight kernel: structural / exact-math check against the reference.
    packed_f32 = pack_lstmar_params(master, dim_encoded, dim_output, jnp.float32)
    out_f32 = jax.block_until_ready(jax.jit(lambda v: lstmar_forward(v, packed_f32))(x))
    assert out_f32.shape == (N, K, num_blocks, dim_output), out_f32.shape
    err32 = float(jnp.max(jnp.abs(out_f32 - ref)))
    assert err32 < 1e-3, f"f32 kernel mismatch vs reference: max abs err {err32}"

    # 2) bf16-weight kernel (recommended perf config): quantization-tolerant check.
    packed_bf16 = pack_lstmar_params(master, dim_encoded, dim_output, jnp.bfloat16)
    out_bf16 = jax.block_until_ready(jax.jit(lambda v: lstmar_forward(v, packed_bf16))(x))
    assert out_bf16.shape == (N, K, num_blocks, dim_output), out_bf16.shape
    err16 = float(jnp.max(jnp.abs(out_bf16 - ref)))
    assert err16 < 7.5e-2, f"bf16 kernel mismatch vs reference: max abs err {err16}"

    print("KERNEL_OK")
</pallas_src>

<mosaic_0001>
module attributes {stable_mosaic.version = 11 : i64} {
  func.func @_lstm_stack_kernel(%arg0: i32, %arg1: memref<64x128xf32, #tpu.memory_space<vmem>>, %arg2: memref<1x128x128xf32, #tpu.memory_space<vmem>>, %arg3: memref<1x32x128xf32, #tpu.memory_space<vmem>>, %arg4: memref<1x1x128xf32, #tpu.memory_space<vmem>>, %arg5: memref<64x32xf32, #tpu.memory_space<vmem>>, %arg6: memref<64x128xf32, #tpu.memory_space<vmem>>) attributes {dimension_semantics = [#tpu.dimension_semantics<arbitrary>], iteration_bounds = array<i64: 4>, scalar_prefetch = 0 : i64, scratch_operands = 1 : i64, tpu.core_type = #tpu.core_type<tc>, window_params = [{pipeline_mode = #tpu.pipeline_mode<synchronous>, transform_indices = @transform_0, window_bounds = array<i64: 64, 128>}, {transform_indices = @transform_1, window_bounds = array<i64: 1, 128, 128>}, {transform_indices = @transform_2, window_bounds = array<i64: 1, 32, 128>}, {transform_indices = @transform_3, window_bounds = array<i64: 1, 1, 128>}, {pipeline_mode = #tpu.pipeline_mode<synchronous>, transform_indices = @transform_4, window_bounds = array<i64: 64, 32>}]} {
    %c0_i32 = arith.constant 0 : i32
    %0 = arith.cmpi eq, %arg0, %c0_i32 : i32
    %1 = arith.extui %0 : i1 to i32
    %c0_i32_0 = arith.constant 0 : i32
    %2 = arith.cmpi ne, %1, %c0_i32_0 : i32
    scf.if %2 {
      %c0_62 = arith.constant 0 : index
      %c0_63 = arith.constant 0 : index
      %273 = vector.load %arg1[%c0_62, %c0_63] : memref<64x128xf32, #tpu.memory_space<vmem>>, vector<64x128xf32>
      %c0_64 = arith.constant 0 : index
      %c0_65 = arith.constant 0 : index
      %c0_66 = arith.constant 0 : index
      %274 = vector.load %arg2[%c0_64, %c0_65, %c0_66] : memref<1x128x128xf32, #tpu.memory_space<vmem>>, vector<1x128x128xf32>
      %275 = vector.shape_cast %274 : vector<1x128x128xf32> to vector<128x128xf32>
      %cst_67 = arith.constant dense<0.000000e+00> : vector<64x128xf32>
      %276 = tpu.matmul %273, %275, %cst_67 {dimension_numbers = #tpu.dot_dimension_numbers<[1], [0], [0], [1], [0, 0, 1, 1], [], []>} : vector<64x128xf32>, vector<128x128xf32>, vector<64x128xf32> -> vector<64x128xf32>
      %c0_68 = arith.constant 0 : index
      %c0_69 = arith.constant 0 : index
      %c0_70 = arith.constant 0 : index
      %277 = vector.load %arg4[%c0_68, %c0_69, %c0_70] : memref<1x1x128xf32, #tpu.memory_space<vmem>>, vector<1x1x128xf32>
      %278 = vector.shape_cast %277 : vector<1x1x128xf32> to vector<1x128xf32>
      %279 = vector.broadcast %278 : vector<1x128xf32> to vector<64x128xf32>
      %280 = arith.addf %276, %279 : vector<64x128xf32>
      %c0_71 = arith.constant 0 : index
      %c0_72 = arith.constant 0 : index
      %281 = vector.load %arg6[%c0_71, %c0_72] : memref<64x128xf32, #tpu.memory_space<vmem>>, vector<64x128xf32>
      tpu.vector_store %arg6[%c0_71, %c0_72], %280 {strides = array<i32>} : memref<64x128xf32, #tpu.memory_space<vmem>>, vector<64x128xf32>,
    } else {
    }
    %c0_i32_1 = arith.constant 0 : i32
    %3 = arith.cmpi sgt, %arg0, %c0_i32_1 : i32
    %4 = arith.extui %3 : i1 to i32
    %c0_i32_2 = arith.constant 0 : i32
    %5 = arith.cmpi ne, %4, %c0_i32_2 : i32
    scf.if %5 {
      %c0_62 = arith.constant 0 : index
      %c0_63 = arith.constant 0 : index
      %273 = vector.load %arg5[%c0_62, %c0_63] : memref<64x32xf32, #tpu.memory_space<vmem>>, vector<64x32xf32>
      %c0_64 = arith.constant 0 : index
      %c0_65 = arith.constant 0 : index
      %c0_66 = arith.constant 0 : index
      %274 = vector.load %arg2[%c0_64, %c0_65, %c0_66] : memref<1x128x128xf32, #tpu.memory_space<vmem>>, vector<1x32x128xf32>
      %275 = vector.shape_cast %274 : vector<1x32x128xf32> to vector<32x128xf32>
      %cst_67 = arith.constant dense<0.000000e+00> : vector<64x128xf32>
      %276 = tpu.matmul %273, %275, %cst_67 {dimension_numbers = #tpu.dot_dimension_numbers<[1], [0], [0], [1], [0, 0, 1, 1], [], []>} : vector<64x32xf32>, vector<32x128xf32>, vector<64x128xf32> -> vector<64x128xf32>
      %c0_68 = arith.constant 0 : index
      %c0_69 = arith.constant 0 : index
      %c0_70 = arith.constant 0 : index
      %277 = vector.load %arg4[%c0_68, %c0_69, %c0_70] : memref<1x1x128xf32, #tpu.memory_space<vmem>>, vector<1x1x128xf32>
      %278 = vector.shape_cast %277 : vector<1x1x128xf32> to vector<1x128xf32>
      %279 = vector.broadcast %278 : vector<1x128xf32> to vector<64x128xf32>
      %280 = arith.addf %276, %279 : vector<64x128xf32>
      %c0_71 = arith.constant 0 : index
      %c0_72 = arith.constant 0 : index
      %281 = vector.load %arg6[%c0_71, %c0_72] : memref<64x128xf32, #tpu.memory_space<vmem>>, vector<64x128xf32>
      tpu.vector_store %arg6[%c0_71, %c0_72], %280 {strides = array<i32>} : memref<64x128xf32, #tpu.memory_space<vmem>>, vector<64x128xf32>,
    } else {
    }
    %c0 = arith.constant 0 : index
    %c0_3 = arith.constant 0 : index
    %c0_4 = arith.constant 0 : index
    %6 = vector.load %arg3[%c0, %c0_3, %c0_4] : memref<1x32x128xf32, #tpu.memory_space<vmem>>, vector<1x32x128xf32>
    %7 = vector.shape_cast %6 : vector<1x32x128xf32> to vector<32x128xf32>
    %cst = arith.constant 0.000000e+00 : f32
    %8 = vector.broadcast %cst : f32 to vector<8x32xf32>
    %c0_i32_5 = arith.constant 0 : i32
    %c8_i32 = arith.constant 8 : i32
    %9 = arith.muli %c0_i32_5, %c8_i32 : i32
    %10 = tpu.assume_multiple %9, 8 : i32
    %11 = arith.index_cast %10 : i32 to index
    %c0_6 = arith.constant 0 : index
    %12 = vector.load %arg6[%11, %c0_6] : memref<64x128xf32, #tpu.memory_space<vmem>>, vector<8x128xf32>
    %cst_7 = arith.constant dense<0.000000e+00> : vector<8x128xf32>
    %13 = tpu.matmul %8, %7, %cst_7 {dimension_numbers = #tpu.dot_dimension_numbers<[1], [0], [0], [1], [0, 0, 1, 1], [], []>} : vector<8x32xf32>, vector<32x128xf32>, vector<8x128xf32> -> vector<8x128xf32>
    %14 = arith.addf %12, %13 : vector<8x128xf32>
    %15 = vector.extract_strided_slice %14 {offsets = [0, 0], sizes = [8, 32], strides = [1, 1]} : vector<8x128xf32> to vector<8x32xf32>
    %16 = arith.negf %15 : vector<8x32xf32>
    %17 = math.exp %16 : vector<8x32xf32>
    %cst_8 = arith.constant 1.000000e+00 : f32
    %18 = vector.broadcast %cst_8 : f32 to vector<8x32xf32>
    %19 = arith.addf %18, %17 : vector<8x32xf32>
    %20 = arith.divf %18, %19 : vector<8x32xf32>
    %21 = vector.extract_strided_slice %14 {offsets = [0, 32], sizes = [8, 32], strides = [1, 1]} : vector<8x128xf32> to vector<8x32xf32>
    %22 = arith.negf %21 : vector<8x32xf32>
    %23 = math.exp %22 : vector<8x32xf32>
    %cst_9 = arith.constant 1.000000e+00 : f32
    %24 = vector.broadcast %cst_9 : f32 to vector<8x32xf32>
    %25 = arith.addf %24, %23 : vector<8x32xf32>
    %26 = arith.divf %24, %25 : vector<8x32xf32>
    %27 = vector.extract_strided_slice %14 {offsets = [0, 64], sizes = [8, 32], strides = [1, 1]} : vector<8x128xf32> to vector<8x32xf32>
    %28 = math.tanh %27 : vector<8x32xf32>
    %29 = vector.extract_strided_slice %14 {offsets = [0, 96], sizes = [8, 32], strides = [1, 1]} : vector<8x128xf32> to vector<8x32xf32>
    %30 = arith.negf %29 : vector<8x32xf32>
    %31 = math.exp %30 : vector<8x32xf32>
    %cst_10 = arith.constant 1.000000e+00 : f32
    %32 = vector.broadcast %cst_10 : f32 to vector<8x32xf32>
    %33 = arith.addf %32, %31 : vector<8x32xf32>
    %34 = arith.divf %32, %33 : vector<8x32xf32>
    %35 = arith.mulf %26, %8 : vector<8x32xf32>
    %36 = arith.mulf %20, %28 : vector<8x32xf32>
    %37 = arith.addf %35, %36 : vector<8x32xf32>
    %38 = math.tanh %37 : vector<8x32xf32>
    %39 = arith.mulf %34, %38 : vector<8x32xf32>
    %40 = arith.index_cast %10 : i32 to index
    %c0_11 = arith.constant 0 : index
    %41 = vector.load %arg5[%40, %c0_11] : memref<64x32xf32, #tpu.memory_space<vmem>>, vector<8x32xf32>
    tpu.vector_store %arg5[%40, %c0_11], %39 {strides = array<i32>} : memref<64x32xf32, #tpu.memory_space<vmem>>, vector<8x32xf32>,
    %c1_i32 = arith.constant 1 : i32
    %c8_i32_12 = arith.constant 8 : i32
    %42 = arith.muli %c1_i32, %c8_i32_12 : i32
    %43 = tpu.assume_multiple %42, 8 : i32
    %44 = arith.index_cast %43 : i32 to index
    %c0_13 = arith.constant 0 : index
    %45 = vector.load %arg6[%44, %c0_13] : memref<64x128xf32, #tpu.memory_space<vmem>>, vector<8x128xf32>
    %cst_14 = arith.constant dense<0.000000e+00> : vector<8x128xf32>
    %46 = tpu.matmul %39, %7, %cst_14 {dimension_numbers = #tpu.dot_dimension_numbers<[1], [0], [0], [1], [0, 0, 1, 1], [], []>} : vector<8x32xf32>, vector<32x128xf32>, vector<8x128xf32> -> vector<8x128xf32>
    %47 = arith.addf %45, %46 : vector<8x128xf32>
    %48 = vector.extract_strided_slice %47 {offsets = [0, 0], sizes = [8, 32], strides = [1, 1]} : vector<8x128xf32> to vector<8x32xf32>
    %49 = arith.negf %48 : vector<8x32xf32>
    %50 = math.exp %49 : vector<8x32xf32>
    %cst_15 = arith.constant 1.000000e+00 : f32
    %51 = vector.broadcast %cst_15 : f32 to vector<8x32xf32>
    %52 = arith.addf %51, %50 : vector<8x32xf32>
    %53 = arith.divf %51, %52 : vector<8x32xf32>
    %54 = vector.extract_strided_slice %47 {offsets = [0, 32], sizes = [8, 32], strides = [1, 1]} : vector<8x128xf32> to vector<8x32xf32>
    %55 = arith.negf %54 : vector<8x32xf32>
    %56 = math.exp %55 : vector<8x32xf32>
    %cst_16 = arith.constant 1.000000e+00 : f32
    %57 = vector.broadcast %cst_16 : f32 to vector<8x32xf32>
    %58 = arith.addf %57, %56 : vector<8x32xf32>
    %59 = arith.divf %57, %58 : vector<8x32xf32>
    %60 = vector.extract_strided_slice %47 {offsets = [0, 64], sizes = [8, 32], strides = [1, 1]} : vector<8x128xf32> to vector<8x32xf32>
    %61 = math.tanh %60 : vector<8x32xf32>
    %62 = vector.extract_strided_slice %47 {offsets = [0, 96], sizes = [8, 32], strides = [1, 1]} : vector<8x128xf32> to vector<8x32xf32>
    %63 = arith.negf %62 : vector<8x32xf32>
    %64 = math.exp %63 : vector<8x32xf32>
    %cst_17 = arith.constant 1.000000e+00 : f32
    %65 = vector.broadcast %cst_17 : f32 to vector<8x32xf32>
    %66 = arith.addf %65, %64 : vector<8x32xf32>
    %67 = arith.divf %65, %66 : vector<8x32xf32>
    %68 = arith.mulf %59, %37 : vector<8x32xf32>
    %69 = arith.mulf %53, %61 : vector<8x32xf32>
    %70 = arith.addf %68, %69 : vector<8x32xf32>
    %71 = math.tanh %70 : vector<8x32xf32>
    %72 = arith.mulf %67, %71 : vector<8x32xf32>
    %73 = arith.index_cast %43 : i32 to index
    %c0_18 = arith.constant 0 : index
    %74 = vector.load %arg5[%73, %c0_18] : memref<64x32xf32, #tpu.memory_space<vmem>>, vector<8x32xf32>
    tpu.vector_store %arg5[%73, %c0_18], %72 {strides = array<i32>} : memref<64x32xf32, #tpu.memory_space<vmem>>, vector<8x32xf32>,
    %c2_i32 = arith.constant 2 : i32
    %c8_i32_19 = arith.constant 8 : i32
    %75 = arith.muli %c2_i32, %c8_i32_19 : i32
    %76 = tpu.assume_multiple %75, 8 : i32
    %77 = arith.index_cast %76 : i32 to index
    %c0_20 = arith.constant 0 : index
    %78 = vector.load %arg6[%77, %c0_20] : memref<64x128xf32, #tpu.memory_space<vmem>>, vector<8x128xf32>
    %cst_21 = arith.constant dense<0.000000e+00> : vector<8x128xf32>
    %79 = tpu.matmul %72, %7, %cst_21 {dimension_numbers = #tpu.dot_dimension_numbers<[1], [0], [0], [1], [0, 0, 1, 1], [], []>} : vector<8x32xf32>, vector<32x128xf32>, vector<8x128xf32> -> vector<8x128xf32>
    %80 = arith.addf %78, %79 : vector<8x128xf32>
    %81 = vector.extract_strided_slice %80 {offsets = [0, 0], sizes = [8, 32], strides = [1, 1]} : vector<8x128xf32> to vector<8x32xf32>
    %82 = arith.negf %81 : vector<8x32xf32>
    %83 = math.exp %82 : vector<8x32xf32>
    %cst_22 = arith.constant 1.000000e+00 : f32
    %84 = vector.broadcast %cst_22 : f32 to vector<8x32xf32>
    %85 = arith.addf %84, %83 : vector<8x32xf32>
    %86 = arith.divf %84, %85 : vector<8x32xf32>
    %87 = vector.extract_strided_slice %80 {offsets = [0, 32], sizes = [8, 32], strides = [1, 1]} : vector<8x128xf32> to vector<8x32xf32>
    %88 = arith.negf %87 : vector<8x32xf32>
    %89 = math.exp %88 : vector<8x32xf32>
    %cst_23 = arith.constant 1.000000e+00 : f32
    %90 = vector.broadcast %cst_23 : f32 to vector<8x32xf32>
    %91 = arith.addf %90, %89 : vector<8x32xf32>
    %92 = arith.divf %90, %91 : vector<8x32xf32>
    %93 = vector.extract_strided_slice %80 {offsets = [0, 64], sizes = [8, 32], strides = [1, 1]} : vector<8x128xf32> to vector<8x32xf32>
    %94 = math.tanh %93 : vector<8x32xf32>
    %95 = vector.extract_strided_slice %80 {offsets = [0, 96], sizes = [8, 32], strides = [1, 1]} : vector<8x128xf32> to vector<8x32xf32>
    %96 = arith.negf %95 : vector<8x32xf32>
    %97 = math.exp %96 : vector<8x32xf32>
    %cst_24 = arith.constant 1.000000e+00 : f32
    %98 = vector.broadcast %cst_24 : f32 to vector<8x32xf32>
    %99 = arith.addf %98, %97 : vector<8x32xf32>
    %100 = arith.divf %98, %99 : vector<8x32xf32>
    %101 = arith.mulf %92, %70 : vector<8x32xf32>
    %102 = arith.mulf %86, %94 : vector<8x32xf32>
    %103 = arith.addf %101, %102 : vector<8x32xf32>
    %104 = math.tanh %103 : vector<8x32xf32>
    %105 = arith.mulf %100, %104 : vector<8x32xf32>
    %106 = arith.index_cast %76 : i32 to index
    %c0_25 = arith.constant 0 : index
    %107 = vector.load %arg5[%106, %c0_25] : memref<64x32xf32, #tpu.memory_space<vmem>>, vector<8x32xf32>
    tpu.vector_store %arg5[%106, %c0_25], %105 {strides = array<i32>} : memref<64x32xf32, #tpu.memory_space<vmem>>, vector<8x32xf32>,
    %c3_i32 = arith.constant 3 : i32
    %c8_i32_26 = arith.constant 8 : i32
    %108 = arith.muli %c3_i32, %c8_i32_26 : i32
    %109 = tpu.assume_multiple %108, 8 : i32
    %110 = arith.index_cast %109 : i32 to index
    %c0_27 = arith.constant 0 : index
    %111 = vector.load %arg6[%110, %c0_27] : memref<64x128xf32, #tpu.memory_space<vmem>>, vector<8x128xf32>
    %cst_28 = arith.constant dense<0.000000e+00> : vector<8x128xf32>
    %112 = tpu.matmul %105, %7, %cst_28 {dimension_numbers = #tpu.dot_dimension_numbers<[1], [0], [0], [1], [0, 0, 1, 1], [], []>} : vector<8x32xf32>, vector<32x128xf32>, vector<8x128xf32> -> vector<8x128xf32>
    %113 = arith.addf %111, %112 : vector<8x128xf32>
    %114 = vector.extract_strided_slice %113 {offsets = [0, 0], sizes = [8, 32], strides = [1, 1]} : vector<8x128xf32> to vector<8x32xf32>
    %115 = arith.negf %114 : vector<8x32xf32>
    %116 = math.exp %115 : vector<8x32xf32>
    %cst_29 = arith.constant 1.000000e+00 : f32
    %117 = vector.broadcast %cst_29 : f32 to vector<8x32xf32>
    %118 = arith.addf %117, %116 : vector<8x32xf32>
    %119 = arith.divf %117, %118 : vector<8x32xf32>
    %120 = vector.extract_strided_slice %113 {offsets = [0, 32], sizes = [8, 32], strides = [1, 1]} : vector<8x128xf32> to vector<8x32xf32>
    %121 = arith.negf %120 : vector<8x32xf32>
    %122 = math.exp %121 : vector<8x32xf32>
    %cst_30 = arith.constant 1.000000e+00 : f32
    %123 = vector.broadcast %cst_30 : f32 to vector<8x32xf32>
    %124 = arith.addf %123, %122 : vector<8x32xf32>
    %125 = arith.divf %123, %124 : vector<8x32xf32>
    %126 = vector.extract_strided_slice %113 {offsets = [0, 64], sizes = [8, 32], strides = [1, 1]} : vector<8x128xf32> to vector<8x32xf32>
    %127 = math.tanh %126 : vector<8x32xf32>
    %128 = vector.extract_strided_slice %113 {offsets = [0, 96], sizes = [8, 32], strides = [1, 1]} : vector<8x128xf32> to vector<8x32xf32>
    %129 = arith.negf %128 : vector<8x32xf32>
    %130 = math.exp %129 : vector<8x32xf32>
    %cst_31 = arith.constant 1.000000e+00 : f32
    %131 = vector.broadcast %cst_31 : f32 to vector<8x32xf32>
    %132 = arith.addf %131, %130 : vector<8x32xf32>
    %133 = arith.divf %131, %132 : vector<8x32xf32>
    %134 = arith.mulf %125, %103 : vector<8x32xf32>
    %135 = arith.mulf %119, %127 : vector<8x32xf32>
    %136 = arith.addf %134, %135 : vector<8x32xf32>
    %137 = math.tanh %136 : vector<8x32xf32>
    %138 = arith.mulf %133, %137 : vector<8x32xf32>
    %139 = arith.index_cast %109 : i32 to index
    %c0_32 = arith.constant 0 : index
    %140 = vector.load %arg5[%139, %c0_32] : memref<64x32xf32, #tpu.memory_space<vmem>>, vector<8x32xf32>
    tpu.vector_store %arg5[%139, %c0_32], %138 {strides = array<i32>} : memref<64x32xf32, #tpu.memory_space<vmem>>, vector<8x32xf32>,
    %c4_i32 = arith.constant 4 : i32
    %c8_i32_33 = arith.constant 8 : i32
    %141 = arith.muli %c4_i32, %c8_i32_33 : i32
    %142 = tpu.assume_multiple %141, 8 : i32
    %143 = arith.index_cast %142 : i32 to index
    %c0_34 = arith.constant 0 : index
    %144 = vector.load %arg6[%143, %c0_34] : memref<64x128xf32, #tpu.memory_space<vmem>>, vector<8x128xf32>
    %cst_35 = arith.constant dense<0.000000e+00> : vector<8x128xf32>
    %145 = tpu.matmul %138, %7, %cst_35 {dimension_numbers = #tpu.dot_dimension_numbers<[1], [0], [0], [1], [0, 0, 1, 1], [], []>} : vector<8x32xf32>, vector<32x128xf32>, vector<8x128xf32> -> vector<8x128xf32>
    %146 = arith.addf %144, %145 : vector<8x128xf32>
    %147 = vector.extract_strided_slice %146 {offsets = [0, 0], sizes = [8, 32], strides = [1, 1]} : vector<8x128xf32> to vector<8x32xf32>
    %148 = arith.negf %147 : vector<8x32xf32>
    %149 = math.exp %148 : vector<8x32xf32>
    %cst_36 = arith.constant 1.000000e+00 : f32
    %150 = vector.broadcast %cst_36 : f32 to vector<8x32xf32>
    %151 = arith.addf %150, %149 : vector<8x32xf32>
    %152 = arith.divf %150, %151 : vector<8x32xf32>
    %153 = vector.extract_strided_slice %146 {offsets = [0, 32], sizes = [8, 32], strides = [1, 1]} : vector<8x128xf32> to vector<8x32xf32>
    %154 = arith.negf %153 : vector<8x32xf32>
    %155 = math.exp %154 : vector<8x32xf32>
    %cst_37 = arith.constant 1.000000e+00 : f32
    %156 = vector.broadcast %cst_37 : f32 to vector<8x32xf32>
    %157 = arith.addf %156, %155 : vector<8x32xf32>
    %158 = arith.divf %156, %157 : vector<8x32xf32>
    %159 = vector.extract_strided_slice %146 {offsets = [0, 64], sizes = [8, 32], strides = [1, 1]} : vector<8x128xf32> to vector<8x32xf32>
    %160 = math.tanh %159 : vector<8x32xf32>
    %161 = vector.extract_strided_slice %146 {offsets = [0, 96], sizes = [8, 32], strides = [1, 1]} : vector<8x128xf32> to vector<8x32xf32>
    %162 = arith.negf %161 : vector<8x32xf32>
    %163 = math.exp %162 : vector<8x32xf32>
    %cst_38 = arith.constant 1.000000e+00 : f32
    %164 = vector.broadcast %cst_38 : f32 to vector<8x32xf32>
    %165 = arith.addf %164, %163 : vector<8x32xf32>
    %166 = arith.divf %164, %165 : vector<8x32xf32>
    %167 = arith.mulf %158, %136 : vector<8x32xf32>
    %168 = arith.mulf %152, %160 : vector<8x32xf32>
    %169 = arith.addf %167, %168 : vector<8x32xf32>
    %170 = math.tanh %169 : vector<8x32xf32>
    %171 = arith.mulf %166, %170 : vector<8x32xf32>
    %172 = arith.index_cast %142 : i32 to index
    %c0_39 = arith.constant 0 : index
    %173 = vector.load %arg5[%172, %c0_39] : memref<64x32xf32, #tpu.memory_space<vmem>>, vector<8x32xf32>
    tpu.vector_store %arg5[%172, %c0_39], %171 {strides = array<i32>} : memref<64x32xf32, #tpu.memory_space<vmem>>, vector<8x32xf32>,
    %c5_i32 = arith.constant 5 : i32
    %c8_i32_40 = arith.constant 8 : i32
    %174 = arith.muli %c5_i32, %c8_i32_40 : i32
    %175 = tpu.assume_multiple %174, 8 : i32
    %176 = arith.index_cast %175 : i32 to index
    %c0_41 = arith.constant 0 : index
    %177 = vector.load %arg6[%176, %c0_41] : memref<64x128xf32, #tpu.memory_space<vmem>>, vector<8x128xf32>
    %cst_42 = arith.constant dense<0.000000e+00> : vector<8x128xf32>
    %178 = tpu.matmul %171, %7, %cst_42 {dimension_numbers = #tpu.dot_dimension_numbers<[1], [0], [0], [1], [0, 0, 1, 1], [], []>} : vector<8x32xf32>, vector<32x128xf32>, vector<8x128xf32> -> vector<8x128xf32>
    %179 = arith.addf %177, %178 : vector<8x128xf32>
    %180 = vector.extract_strided_slice %179 {offsets = [0, 0], sizes = [8, 32], strides = [1, 1]} : vector<8x128xf32> to vector<8x32xf32>
    %181 = arith.negf %180 : vector<8x32xf32>
    %182 = math.exp %181 : vector<8x32xf32>
    %cst_43 = arith.constant 1.000000e+00 : f32
    %183 = vector.broadcast %cst_43 : f32 to vector<8x32xf32>
    %184 = arith.addf %183, %182 : vector<8x32xf32>
    %185 = arith.divf %183, %184 : vector<8x32xf32>
    %186 = vector.extract_strided_slice %179 {offsets = [0, 32], sizes = [8, 32], strides = [1, 1]} : vector<8x128xf32> to vector<8x32xf32>
    %187 = arith.negf %186 : vector<8x32xf32>
    %188 = math.exp %187 : vector<8x32xf32>
    %cst_44 = arith.constant 1.000000e+00 : f32
    %189 = vector.broadcast %cst_44 : f32 to vector<8x32xf32>
    %190 = arith.addf %189, %188 : vector<8x32xf32>
    %191 = arith.divf %189, %190 : vector<8x32xf32>
    %192 = vector.extract_strided_slice %179 {offsets = [0, 64], sizes = [8, 32], strides = [1, 1]} : vector<8x128xf32> to vector<8x32xf32>
    %193 = math.tanh %192 : vector<8x32xf32>
    %194 = vector.extract_strided_slice %179 {offsets = [0, 96], sizes = [8, 32], strides = [1, 1]} : vector<8x128xf32> to vector<8x32xf32>
    %195 = arith.negf %194 : vector<8x32xf32>
    %196 = math.exp %195 : vector<8x32xf32>
    %cst_45 = arith.constant 1.000000e+00 : f32
    %197 = vector.broadcast %cst_45 : f32 to vector<8x32xf32>
    %198 = arith.addf %197, %196 : vector<8x32xf32>
    %199 = arith.divf %197, %198 : vector<8x32xf32>
    %200 = arith.mulf %191, %169 : vector<8x32xf32>
    %201 = arith.mulf %185, %193 : vector<8x32xf32>
    %202 = arith.addf %200, %201 : vector<8x32xf32>
    %203 = math.tanh %202 : vector<8x32xf32>
    %204 = arith.mulf %199, %203 : vector<8x32xf32>
    %205 = arith.index_cast %175 : i32 to index
    %c0_46 = arith.constant 0 : index
    %206 = vector.load %arg5[%205, %c0_46] : memref<64x32xf32, #tpu.memory_space<vmem>>, vector<8x32xf32>
    tpu.vector_store %arg5[%205, %c0_46], %204 {strides = array<i32>} : memref<64x32xf32, #tpu.memory_space<vmem>>, vector<8x32xf32>,
    %c6_i32 = arith.constant 6 : i32
    %c8_i32_47 = arith.constant 8 : i32
    %207 = arith.muli %c6_i32, %c8_i32_47 : i32
    %208 = tpu.assume_multiple %207, 8 : i32
    %209 = arith.index_cast %208 : i32 to index
    %c0_48 = arith.constant 0 : index
    %210 = vector.load %arg6[%209, %c0_48] : memref<64x128xf32, #tpu.memory_space<vmem>>, vector<8x128xf32>
    %cst_49 = arith.constant dense<0.000000e+00> : vector<8x128xf32>
    %211 = tpu.matmul %204, %7, %cst_49 {dimension_numbers = #tpu.dot_dimension_numbers<[1], [0], [0], [1], [0, 0, 1, 1], [], []>} : vector<8x32xf32>, vector<32x128xf32>, vector<8x128xf32> -> vector<8x128xf32>
    %212 = arith.addf %210, %211 : vector<8x128xf32>
    %213 = vector.extract_strided_slice %212 {offsets = [0, 0], sizes = [8, 32], strides = [1, 1]} : vector<8x128xf32> to vector<8x32xf32>
    %214 = arith.negf %213 : vector<8x32xf32>
    %215 = math.exp %214 : vector<8x32xf32>
    %cst_50 = arith.constant 1.000000e+00 : f32
    %216 = vector.broadcast %cst_50 : f32 to vector<8x32xf32>
    %217 = arith.addf %216, %215 : vector<8x32xf32>
    %218 = arith.divf %216, %217 : vector<8x32xf32>
    %219 = vector.extract_strided_slice %212 {offsets = [0, 32], sizes = [8, 32], strides = [1, 1]} : vector<8x128xf32> to vector<8x32xf32>
    %220 = arith.negf %219 : vector<8x32xf32>
    %221 = math.exp %220 : vector<8x32xf32>
    %cst_51 = arith.constant 1.000000e+00 : f32
    %222 = vector.broadcast %cst_51 : f32 to vector<8x32xf32>
    %223 = arith.addf %222, %221 : vector<8x32xf32>
    %224 = arith.divf %222, %223 : vector<8x32xf32>
    %225 = vector.extract_strided_slice %212 {offsets = [0, 64], sizes = [8, 32], strides = [1, 1]} : vector<8x128xf32> to vector<8x32xf32>
    %226 = math.tanh %225 : vector<8x32xf32>
    %227 = vector.extract_strided_slice %212 {offsets = [0, 96], sizes = [8, 32], strides = [1, 1]} : vector<8x128xf32> to vector<8x32xf32>
    %228 = arith.negf %227 : vector<8x32xf32>
    %229 = math.exp %228 : vector<8x32xf32>
    %cst_52 = arith.constant 1.000000e+00 : f32
    %230 = vector.broadcast %cst_52 : f32 to vector<8x32xf32>
    %231 = arith.addf %230, %229 : vector<8x32xf32>
    %232 = arith.divf %230, %231 : vector<8x32xf32>
    %233 = arith.mulf %224, %202 : vector<8x32xf32>
    %234 = arith.mulf %218, %226 : vector<8x32xf32>
    %235 = arith.addf %233, %234 : vector<8x32xf32>
    %236 = math.tanh %235 : vector<8x32xf32>
    %237 = arith.mulf %232, %236 : vector<8x32xf32>
    %238 = arith.index_cast %208 : i32 to index
    %c0_53 = arith.constant 0 : index
    %239 = vector.load %arg5[%238, %c0_53] : memref<64x32xf32, #tpu.memory_space<vmem>>, vector<8x32xf32>
    tpu.vector_store %arg5[%238, %c0_53], %237 {strides = array<i32>} : memref<64x32xf32, #tpu.memory_space<vmem>>, vector<8x32xf32>,
    %c7_i32 = arith.constant 7 : i32
    %c8_i32_54 = arith.constant 8 : i32
    %240 = arith.muli %c7_i32, %c8_i32_54 : i32
    %241 = tpu.assume_multiple %240, 8 : i32
    %242 = arith.index_cast %241 : i32 to index
    %c0_55 = arith.constant 0 : index
    %243 = vector.load %arg6[%242, %c0_55] : memref<64x128xf32, #tpu.memory_space<vmem>>, vector<8x128xf32>
    %cst_56 = arith.constant dense<0.000000e+00> : vector<8x128xf32>
    %244 = tpu.matmul %237, %7, %cst_56 {dimension_numbers = #tpu.dot_dimension_numbers<[1], [0], [0], [1], [0, 0, 1, 1], [], []>} : vector<8x32xf32>, vector<32x128xf32>, vector<8x128xf32> -> vector<8x128xf32>
    %245 = arith.addf %243, %244 : vector<8x128xf32>
    %246 = vector.extract_strided_slice %245 {offsets = [0, 0], sizes = [8, 32], strides = [1, 1]} : vector<8x128xf32> to vector<8x32xf32>
    %247 = arith.negf %246 : vector<8x32xf32>
    %248 = math.exp %247 : vector<8x32xf32>
    %cst_57 = arith.constant 1.000000e+00 : f32
    %249 = vector.broadcast %cst_57 : f32 to vector<8x32xf32>
    %250 = arith.addf %249, %248 : vector<8x32xf32>
    %251 = arith.divf %249, %250 : vector<8x32xf32>
    %252 = vector.extract_strided_slice %245 {offsets = [0, 32], sizes = [8, 32], strides = [1, 1]} : vector<8x128xf32> to vector<8x32xf32>
    %253 = arith.negf %252 : vector<8x32xf32>
    %254 = math.exp %253 : vector<8x32xf32>
    %cst_58 = arith.constant 1.000000e+00 : f32
    %255 = vector.broadcast %cst_58 : f32 to vector<8x32xf32>
    %256 = arith.addf %255, %254 : vector<8x32xf32>
    %257 = arith.divf %255, %256 : vector<8x32xf32>
    %258 = vector.extract_strided_slice %245 {offsets = [0, 64], sizes = [8, 32], strides = [1, 1]} : vector<8x128xf32> to vector<8x32xf32>
    %259 = math.tanh %258 : vector<8x32xf32>
    %260 = vector.extract_strided_slice %245 {offsets = [0, 96], sizes = [8, 32], strides = [1, 1]} : vector<8x128xf32> to vector<8x32xf32>
    %261 = arith.negf %260 : vector<8x32xf32>
    %262 = math.exp %261 : vector<8x32xf32>
    %cst_59 = arith.constant 1.000000e+00 : f32
    %263 = vector.broadcast %cst_59 : f32 to vector<8x32xf32>
    %264 = arith.addf %263, %262 : vector<8x32xf32>
    %265 = arith.divf %263, %264 : vector<8x32xf32>
    %266 = arith.mulf %257, %235 : vector<8x32xf32>
    %267 = arith.mulf %251, %259 : vector<8x32xf32>
    %268 = arith.addf %266, %267 : vector<8x32xf32>
    %269 = math.tanh %268 : vector<8x32xf32>
    %270 = arith.mulf %265, %269 : vector<8x32xf32>
    %271 = arith.index_cast %241 : i32 to index
    %c0_60 = arith.constant 0 : index
    %272 = vector.load %arg5[%271, %c0_60] : memref<64x32xf32, #tpu.memory_space<vmem>>, vector<8x32xf32>
    tpu.vector_store %arg5[%271, %c0_60], %270 {strides = array<i32>} : memref<64x32xf32, #tpu.memory_space<vmem>>, vector<8x32xf32>,
    %c8_i32_61 = arith.constant 8 : i32
    return
  }
  func.func @transform_0(%arg0: i32) -> (i32, i32) {
    %c0_i32 = arith.constant 0 : i32
    %c0_i32_0 = arith.constant 0 : i32
    %c0_i32_1 = arith.constant 0 : i32
    return %c0_i32, %c0_i32_0 : i32, i32
  }
  func.func @transform_1(%arg0: i32) -> (i32, i32, i32) {
    %c0_i32 = arith.constant 0 : i32
    %c0_i32_0 = arith.constant 0 : i32
    %c0_i32_1 = arith.constant 0 : i32
    return %arg0, %c0_i32, %c0_i32_0 : i32, i32, i32
  }
  func.func @transform_2(%arg0: i32) -> (i32, i32, i32) {
    %c0_i32 = arith.constant 0 : i32
    %c0_i32_0 = arith.constant 0 : i32
    %c0_i32_1 = arith.constant 0 : i32
    return %arg0, %c0_i32, %c0_i32_0 : i32, i32, i32
  }
  func.func @transform_3(%arg0: i32) -> (i32, i32, i32) {
    %c0_i32 = arith.constant 0 : i32
    %c0_i32_0 = arith.constant 0 : i32
    %c0_i32_1 = arith.constant 0 : i32
    return %arg0, %c0_i32, %c0_i32_0 : i32, i32, i32
  }
  func.func @transform_4(%arg0: i32) -> (i32, i32) {
    %c0_i32 = arith.constant 0 : i32
    %c0_i32_0 = arith.constant 0 : i32
    %c0_i32_1 = arith.constant 0 : i32
    return %c0_i32, %c0_i32_0 : i32, i32
  }
}

</mosaic_0001>

<llo_original>
// kernel: _lambda_.1
$region0: #{_lambda_.1}
  #allocation0 [shape = 'u32[]', space=smem, size = 0x4, offset = 0x4, fixed_abs, tag = 'smem constant byte address 0x4 - core index']
  #allocation1 [shape = 'u32[144,128]{1,0:T(1,128)}', space=vmem, size = 0x12000, scoped, tag = 'internal scratch']
  #allocation2 [shape = 'f32[64,128]{1,0:T(8,128)}', space=vmem, size = 0x8000, scoped, tag = 'scratch operand']
  %s0 = inlined_call_operand.vmem [shape: f32[64,128], index: 0, kind: input, shape index: {}]
  %s1 = inlined_call_operand.hbm [shape: f32[4,128,128], index: 1, kind: input, shape index: {}]
  %s2 = inlined_call_operand.vmem [shape: f32[4,32,128], index: 2, kind: input, shape index: {}]
  %s3 = inlined_call_operand.vmem [shape: f32[4,1,128], index: 3, kind: input, shape index: {}]
  %s4 = inlined_call_operand.vmem [shape: f32[64,32], index: 4, kind: output, shape index: {}]
  %s5 = sld [smem:[#allocation0]]
  $region61: #{_lambda_.1} parent=0
    _
  %s7 = ssub.s32 1, %s5
  %s8 = scalar_select 0, %s7, %s5
  $region1: #{_lambda_.1} parent=0
    #allocation3 [shape = 'u8[131072]{0}', space=vmem, size = 0x20000, scoped, tag = 'input window, operand 1']
    #allocation4 [shape = 's32[2]{0}', space=sflag, size = 0x8, scoped, tag = 'scoped memory for _lambda_.1']
    %9 = vsyncpa [#allocation4], 0
    %s10 = scalar_lea.sflag [#allocation4], 1
    %11 = vsyncpa %s10, 0
    loop: start=0, step=1, limit=6
    $region2: #{_lambda_.1} parent=1 // loop_pre_header
      _
    $region3: #{_lambda_.1} parent=1 // loop_header
      %s13 = sphi 0, %s17
      %p14 = scmp.ge.s32.totalorder %s13, 6
      %s21 = sphi 0, %s21
      %s23 = sphi 0, %s21
      %s24 = sphi 0, %s23
      %s38 = sphi 0, %s24
      %s44 = sphi 0, %s46
      %s47 = sphi 0, %s44
      %s48 = sphi 0, %s47
      %s64 = sphi 0, %s48
      %s70 = sphi 0, %s72
      %s73 = sphi 0, %s70
      %s74 = sphi 0, %s73
      %s90 = sphi 0, %s74
      %s96 = sphi 0, %s98
      %s99 = sphi 0, %s96
      %s100 = sphi 0, %s99
      %s116 = sphi 0, %s100
      %s120 = sphi 0, %s120
      %s122 = sphi 0, %s120
      %s123 = sphi 0, %s122
      %s137 = sphi 0, %s123
    $region4: #{_lambda_.1} parent=1 // loop_header_branch
      %16 = sbr.rel (%p14) target = $region8
    $region5: #{_lambda_.1} parent=1 // loop_body
      %s18 = ssub.s32 %s13, 1
      %s19 = ssub.s32 %s13, 2
      %s20 = sadd.s32 %s13, 1
      %s22 = sadd.s32 %s21, 1
      %p25 = scmp.eq.s32.totalorder %s13, 3
      %p26 = scmp.ne.s32.totalorder %s21, %s23
      %p27 = scmp.eq.s32.totalorder %s13, 0
      %p28 = por %p26, %p27
      %p29 = scmp.ne.s32.totalorder %s21, %s23
      %p30 = scmp.eq.s32.totalorder %s18, 3
      %p31 = por %p29, %p30
      %p32 = scmp.ne.s32.totalorder %s23, %s24
      %p33 = scmp.eq.s32.totalorder %s18, 0
      %p34 = por %p32, %p33
      %p35 = scmp.ne.s32.totalorder %s23, %s24
      %p36 = scmp.eq.s32.totalorder %s19, 3
      %p37 = por %p35, %p36
      %p39 = scmp.ne.s32.totalorder %s24, %s38
      %p40 = scmp.eq.s32.totalorder %s19, 0
      %p41 = por %p39, %p40
      %s42 = ssub.s32 %s13, %s20
      %p43 = scmp.eq.s32.totalorder %s42, 0
      %s45 = sadd.s32 %s44, 1
      %s46 = scalar_select %p43, %s44, %s45
      %p49 = pneg %p43
      %p50 = scmp.eq.s32.totalorder %s13, 3
      %p51 = por %p49, %p50
      %p52 = scmp.ne.s32.totalorder %s44, %s47
      %p53 = scmp.eq.s32.totalorder %s13, 0
      %p54 = por %p52, %p53
      %p55 = scmp.ne.s32.totalorder %s44, %s47
      %p56 = scmp.eq.s32.totalorder %s18, 3
      %p57 = por %p55, %p56
      %p58 = scmp.ne.s32.totalorder %s47, %s48
      %p59 = scmp.eq.s32.totalorder %s18, 0
      %p60 = por %p58, %p59
      %p61 = scmp.ne.s32.totalorder %s47, %s48
      %p62 = scmp.eq.s32.totalorder %s19, 3
      %p63 = por %p61, %p62
      %p65 = scmp.ne.s32.totalorder %s48, %s64
      %p66 = scmp.eq.s32.totalorder %s19, 0
      %p67 = por %p65, %p66
      %s68 = ssub.s32 %s13, %s20
      %p69 = scmp.eq.s32.totalorder %s68, 0
      %s71 = sadd.s32 %s70, 1
      %s72 = scalar_select %p69, %s70, %s71
      %p75 = pneg %p69
      %p76 = scmp.eq.s32.totalorder %s13, 3
      %p77 = por %p75, %p76
      %p78 = scmp.ne.s32.totalorder %s70, %s73
      %p79 = scmp.eq.s32.totalorder %s13, 0
      %p80 = por %p78, %p79
      %p81 = scmp.ne.s32.totalorder %s70, %s73
      %p82 = scmp.eq.s32.totalorder %s18, 3
      %p83 = por %p81, %p82
      %p84 = scmp.ne.s32.totalorder %s73, %s74
      %p85 = scmp.eq.s32.totalorder %s18, 0
      %p86 = por %p84, %p85
      %p87 = scmp.ne.s32.totalorder %s73, %s74
      %p88 = scmp.eq.s32.totalorder %s19, 3
      %p89 = por %p87, %p88
      %p91 = scmp.ne.s32.totalorder %s74, %s90
      %p92 = scmp.eq.s32.totalorder %s19, 0
      %p93 = por %p91, %p92
      %s94 = ssub.s32 %s13, %s20
      %p95 = scmp.eq.s32.totalorder %s94, 0
      %s97 = sadd.s32 %s96, 1
      %s98 = scalar_select %p95, %s96, %s97
      %p101 = pneg %p95
      %p102 = scmp.eq.s32.totalorder %s13, 3
      %p103 = por %p101, %p102
      %p104 = scmp.ne.s32.totalorder %s96, %s99
      %p105 = scmp.eq.s32.totalorder %s13, 0
      %p106 = por %p104, %p105
      %p107 = scmp.ne.s32.totalorder %s96, %s99
      %p108 = scmp.eq.s32.totalorder %s18, 3
      %p109 = por %p107, %p108
      %p110 = scmp.ne.s32.totalorder %s99, %s100
      %p111 = scmp.eq.s32.totalorder %s18, 0
      %p112 = por %p110, %p111
      %p113 = scmp.ne.s32.totalorder %s99, %s100
      %p114 = scmp.eq.s32.totalorder %s19, 3
      %p115 = por %p113, %p114
      %p117 = scmp.ne.s32.totalorder %s100, %s116
      %p118 = scmp.eq.s32.totalorder %s19, 0
      %p119 = por %p117, %p118
      %s121 = sadd.s32 %s120, 1
      %p124 = scmp.eq.s32.totalorder %s13, 3
      %p125 = scmp.ne.s32.totalorder %s120, %s122
      %p126 = scmp.eq.s32.totalorder %s13, 0
      %p127 = por %p125, %p126
      %p128 = scmp.ne.s32.totalorder %s120, %s122
      %p129 = scmp.eq.s32.totalorder %s18, 3
      %p130 = por %p128, %p129
      %p131 = scmp.ne.s32.totalorder %s122, %s123
      %p132 = scmp.eq.s32.totalorder %s18, 0
      %p133 = por %p131, %p132
      %p134 = scmp.ne.s32.totalorder %s122, %s123
      %p135 = scmp.eq.s32.totalorder %s19, 3
      %p136 = por %p134, %p135
      %p138 = scmp.ne.s32.totalorder %s123, %s137
      %p139 = scmp.eq.s32.totalorder %s19, 0
      %p140 = por %p138, %p139
      %p141 = scmp.le.s32.totalorder 1, %s13
      %p142 = scmp.lt.s32.totalorder %s13, 5
      %p143 = pnand %p141, %p142
      %p144 = pneg %p143
      // Predicated region
      $region9: #{_lambda_.1} parent=5 // pred_check
        _
      $region10: #{_lambda_.1} parent=5 // pred_check_branch
        %146 = sbr.rel (%p143) target = $region12
      $region11: #{_lambda_.1} parent=5 // pred_region
        %s147 = ssub.s32 %s13, 1
        // Predicated region
        $region13: #{_lambda_.1} parent=11 // pred_check
          %p148 = pneg %p34
        $region14: #{_lambda_.1} parent=11 // pred_check_branch
          %150 = sbr.rel (%p148) target = $region16
        $region15: #{_lambda_.1} parent=11 // pred_region
          _
        $region16: #{_lambda_.1} parent=11 // pred_fallthru
          _
      $region12: #{_lambda_.1} parent=5 // pred_fallthru
        _
      %p151 = scmp.lt.s32.totalorder %s13, 4
      // Predicated region
      $region17: #{_lambda_.1} parent=5 // pred_check
        %p152 = pneg %p151
      $region18: #{_lambda_.1} parent=5 // pred_check_branch
        %154 = sbr.rel (%p152) target = $region20
      $region19: #{_lambda_.1} parent=5 // pred_region
        // Predicated region
        $region21: #{_lambda_.1} parent=19 // pred_check
          %p155 = pneg %p54
        $region22: #{_lambda_.1} parent=19 // pred_check_branch
          %157 = sbr.rel (%p155) target = $region24
        $region23: #{_lambda_.1} parent=19 // pred_region
          %s158 = sand.u32 %s44, 1
          %s159 = scalar_lea.sflag [#allocation4], %s158
          %s160 = sand.u32 %s44, 1
          %s161 = smul.addr %s160, 128
          %s162 = scalar_lea.vmem [#allocation3], %s161
          %s164 = ssub.s32 2048, 2048
          %165 = vsyncadd %s159, %s164
          %s166 = smul.addr %s13, 16
          %s167 = smul.addr %s166, 128
          %s168 = scalar_lea.hbm %s1, %s167
          %s169 = sshll.u32 %s162, 4
          %s170 = int_to_ptr.vmem [resolvable:$true] %s169
          %175 = dma.hbm_to_vmem [thread:$0]  %s168, 2048, %s170, %s159, 128, 128, 8
        $region24: #{_lambda_.1} parent=19 // pred_fallthru
          _
        // Predicated region
        $region25: #{_lambda_.1} parent=19 // pred_check
          %p176 = pneg %p80
        $region26: #{_lambda_.1} parent=19 // pred_check_branch
          %178 = sbr.rel (%p176) target = $region28
        $region27: #{_lambda_.1} parent=19 // pred_region
          %p179 = scmp.lt.s32.totalorder %s13, 3
          %s180 = scalar_select %p179, %s13, 3
          %s181 = smul.addr %s180, 4
          %s182 = smul.addr %s181, 8
          %s183 = scalar_lea.vmem %s2, %s182
        $region28: #{_lambda_.1} parent=19 // pred_fallthru
          _
        // Predicated region
        $region29: #{_lambda_.1} parent=19 // pred_check
          %p184 = pneg %p106
        $region30: #{_lambda_.1} parent=19 // pred_check_branch
          %186 = sbr.rel (%p184) target = $region32
        $region31: #{_lambda_.1} parent=19 // pred_region
          %p187 = scmp.lt.s32.totalorder %s13, 3
          %s188 = scalar_select %p187, %s13, 3
          %s189 = scalar_lea.vmem %s3, %s188
        $region32: #{_lambda_.1} parent=19 // pred_fallthru
          _
      $region20: #{_lambda_.1} parent=5 // pred_fallthru
        _
      %p190 = scmp.le.s32.totalorder 1, %s13
      %p191 = scmp.lt.s32.totalorder %s13, 5
      %p192 = pnand %p190, %p191
      %p193 = pneg %p192
      // Predicated region
      $region33: #{_lambda_.1} parent=5 // pred_check
        _
      $region34: #{_lambda_.1} parent=5 // pred_check_branch
        %195 = sbr.rel (%p192) target = $region36
      $region35: #{_lambda_.1} parent=5 // pred_region
        %s196 = ssub.s32 %s13, 1
        %s197 = sand.u32 %s47, 1
        %s198 = scalar_lea.sflag [#allocation4], %s197
        %s199 = sand.u32 %s47, 1
        %s200 = smul.addr %s199, 128
        %s201 = scalar_lea.vmem [#allocation3], %s200
        // Predicated region
        $region37: #{_lambda_.1} parent=35 // pred_check
          %p202 = pneg %p60
        $region38: #{_lambda_.1} parent=35 // pred_check_branch
          %204 = sbr.rel (%p202) target = $region40
        $region39: #{_lambda_.1} parent=35 // pred_region
          %205 = dma.done %s198, 2048
        $region40: #{_lambda_.1} parent=35 // pred_fallthru
          _
        %p206 = pneg %p34
        %p207 = pneg %p31
        %s208 = sand.u32 %s47, 1
        %s209 = scalar_lea.sflag [#allocation4], %s208
        %s210 = sand.u32 %s47, 1
        %s211 = smul.addr %s210, 128
        %s212 = scalar_lea.vmem [#allocation3], %s211
        %p213 = pneg %p60
        %p214 = pneg %p57
        %p215 = scmp.lt.s32.totalorder %s18, 3
        %s216 = scalar_select %p215, %s18, 3
        %s217 = smul.addr %s216, 4
        %s218 = smul.addr %s217, 8
        %s219 = scalar_lea.vmem %s2, %s218
        %p220 = pneg %p86
        %p221 = pneg %p83
        %p222 = scmp.lt.s32.totalorder %s18, 3
        %s223 = scalar_select %p222, %s18, 3
        %s224 = scalar_lea.vmem %s3, %s223
        %p225 = pneg %p112
        %p226 = pneg %p109
        %p227 = pneg %p133
        %p228 = pneg %p130
        %p229 = scmp.lt.s32.totalorder %s18, 3
        %s230 = scalar_select %p229, %s18, 3
        %s231 = smul.addr %s230, 4
        %s232 = smul.addr %s231, 8
        %s233 = scalar_lea.vmem %s2, %s232
        %p234 = scmp.lt.s32.totalorder %s18, 3
        %s235 = scalar_select %p234, %s18, 3
        %s236 = scalar_lea.vmem %s3, %s235
        %p237 = scmp.eq.s32.totalorder %s18, 0
        // Predicated region
        $region41: #{_lambda_.1} parent=35 // pred_check
          %p238 = pneg %p237
        $region42: #{_lambda_.1} parent=35 // pred_check_branch
          %240 = sbr.rel (%p238) target = $region44
        $region43: #{_lambda_.1} parent=35 // pred_region
          %v241 = vld [vmem:[%s0] sm:$0xff]
          %v242 = vld [vmem:[%s0 + $0x8] sm:$0xff]
          %v243 = vld [vmem:[%s0 + $0x10] sm:$0xff]
          %v244 = vld [vmem:[%s0 + $0x18] sm:$0xff]
          %v245 = vld [vmem:[%s0 + $0x20] sm:$0xff]
          %v246 = vld [vmem:[%s0 + $0x28] sm:$0xff]
          %v247 = vld [vmem:[%s0 + $0x30] sm:$0xff]
          %v248 = vld [vmem:[%s0 + $0x38] sm:$0xff]
          %v249 = vld [vmem:[%s201] sm:$0xff]
          %v250 = vld [vmem:[%s201 + $0x8] sm:$0xff]
          %v251 = vld [vmem:[%s201 + $0x10] sm:$0xff]
          %v252 = vld [vmem:[%s201 + $0x18] sm:$0xff]
          %v253 = vld [vmem:[%s201 + $0x20] sm:$0xff]
          %v254 = vld [vmem:[%s201 + $0x28] sm:$0xff]
          %v255 = vld [vmem:[%s201 + $0x30] sm:$0xff]
          %v256 = vld [vmem:[%s201 + $0x38] sm:$0xff]
          %v257 = vld [vmem:[%s201 + $0x40] sm:$0xff]
          %v258 = vld [vmem:[%s201 + $0x48] sm:$0xff]
          %v259 = vld [vmem:[%s201 + $0x50] sm:$0xff]
          %v260 = vld [vmem:[%s201 + $0x58] sm:$0xff]
          %v261 = vld [vmem:[%s201 + $0x60] sm:$0xff]
          %v262 = vld [vmem:[%s201 + $0x68] sm:$0xff]
          %v263 = vld [vmem:[%s201 + $0x70] sm:$0xff]
          %v264 = vld [vmem:[%s201 + $0x78] sm:$0xff]
          %v265 = vld [vmem:[%s236] sm:$0x1]
          %v267 = vlaneseq
          %v268 = vshrl.u32 %v267, 7
          %v269 = vsub.s32 0, %v268
          %v270 = vrot.slane %v265, %v269
          %272 = vmatprep.subr.mxu0 0.0
          %273 = vmatpush1.msra.mxu0 %v249
          %274 = vmatprep.subr.mxu0 0.0
          %275 = vmatpush1.msra.mxu0 %v250
          %276 = vmatprep.subr.mxu0 0.0
          %277 = vmatpush1.msra.mxu0 %v251
          %278 = vmatprep.subr.mxu0 0.0
          %279 = vmatpush1.msra.mxu0 %v252
          %280 = vmatprep.subr.mxu0 0.0
          %281 = vmatpush1.msra.mxu0 %v253
          %282 = vmatprep.subr.mxu0 0.0
          %283 = vmatpush1.msra.mxu0 %v254
          %284 = vmatprep.subr.mxu0 0.0
          %285 = vmatpush1.msra.mxu0 %v255
          %286 = vmatprep.subr.mxu0 0.0
          %287 = vmatpush1.msra.mxu0 %v256
          %288 = vmatprep.subr.mxu0 0.0
          %289 = vmatpush1.msra.mxu0 %v257
          %290 = vmatprep.subr.mxu0 0.0
          %291 = vmatpush1.msra.mxu0 %v258
          %292 = vmatprep.subr.mxu0 0.0
          %293 = vmatpush1.msra.mxu0 %v259
          %294 = vmatprep.subr.mxu0 0.0
          %295 = vmatpush1.msra.mxu0 %v260
          %296 = vmatprep.subr.mxu0 0.0
          %297 = vmatpush1.msra.mxu0 %v261
          %298 = vmatprep.subr.mxu0 0.0
          %299 = vmatpush1.msra.mxu0 %v262
          %300 = vmatprep.subr.mxu0 0.0
          %301 = vmatpush1.msra.mxu0 %v263
          %302 = vmatprep.subr.mxu0 0.0
          %303 = vmatpush1.msra.mxu0 %v264
          %304 = vmatprep.subr.mxu0 0.0
          %305 = vmatpush1.msra.mxu0 0.0
          %306 = vmatprep.subr.mxu0 0.0
          %307 = vmatpush1.msra.mxu0 0.0
          %308 = vmatprep.subr.mxu0 0.0
          %309 = vmatpush1.msra.mxu0 0.0
          %310 = vmatprep.subr.mxu0 0.0
          %311 = vmatpush1.msra.mxu0 0.0
          %312 = vmatprep.subr.mxu0 0.0
          %313 = vmatpush1.msra.mxu0 0.0
          %314 = vmatprep.subr.mxu0 0.0
          %315 = vmatpush1.msra.mxu0 0.0
          %316 = vmatprep.subr.mxu0 0.0
          %317 = vmatpush1.msra.mxu0 0.0
          %318 = vmatprep.subr.mxu0 0.0
          %319 = vmatpush1.msra.mxu0 0.0
          %320 = vmatprep.subr.mxu0 0.0
          %321 = vmatpush1.msra.mxu0 0.0
          %322 = vmatprep.subr.mxu0 0.0
          %323 = vmatpush1.msra.mxu0 0.0
          %324 = vmatprep.subr.mxu0 0.0
          %325 = vmatpush1.msra.mxu0 0.0
          %326 = vmatprep.subr.mxu0 0.0
          %327 = vmatpush1.msra.mxu0 0.0
          %328 = vmatprep.subr.mxu0 0.0
          %329 = vmatpush1.msra.mxu0 0.0
          %330 = vmatprep.subr.mxu0 0.0
          %331 = vmatpush1.msra.mxu0 0.0
          %332 = vmatprep.subr.mxu0 0.0
          %333 = vmatpush1.msra.mxu0 0.0
          %334 = vmatprep.subr.mxu0 0.0
          %335 = vmatpush1.msra.mxu0 0.0
          %336 = vmatprep.mubr.f32.mxu0 0.0
          %337 = vmatmul.mubr.f32.gmra.mrb[0].mxu0 %v241
          %v338 = vpop.f32.mrb[0].mxu0
          %v339 = vadd.f32 %v270, %v338
          %v340 = vpop.f32.mrb[0].mxu0
          %341 = vmatprep.mubr.f32.mxu0 0.0
          %342 = vmatmul.mubr.f32.gmra.mrb[0].mxu0 %v242
          %v343 = vpop.f32.mrb[0].mxu0
          %v344 = vadd.f32 %v270, %v343
          %v345 = vpop.f32.mrb[0].mxu0
          %346 = vmatprep.mubr.f32.mxu0 0.0
          %347 = vmatmul.mubr.f32.gmra.mrb[0].mxu0 %v243
          %v348 = vpop.f32.mrb[0].mxu0
          %v349 = vadd.f32 %v270, %v348
          %v350 = vpop.f32.mrb[0].mxu0
          %351 = vmatprep.mubr.f32.mxu0 0.0
          %352 = vmatmul.mubr.f32.gmra.mrb[0].mxu0 %v244
          %v353 = vpop.f32.mrb[0].mxu0
          %v354 = vadd.f32 %v270, %v353
          %v355 = vpop.f32.mrb[0].mxu0
          %356 = vmatprep.mubr.f32.mxu0 0.0
          %357 = vmatmul.mubr.f32.gmra.mrb[0].mxu0 %v245
          %v358 = vpop.f32.mrb[0].mxu0
          %v359 = vadd.f32 %v270, %v358
          %v360 = vpop.f32.mrb[0].mxu0
          %361 = vmatprep.mubr.f32.mxu0 0.0
          %362 = vmatmul.mubr.f32.gmra.mrb[0].mxu0 %v246
          %v363 = vpop.f32.mrb[0].mxu0
          %v364 = vadd.f32 %v270, %v363
          %v365 = vpop.f32.mrb[0].mxu0
          %366 = vmatprep.mubr.f32.mxu0 0.0
          %367 = vmatmul.mubr.f32.gmra.mrb[0].mxu0 %v247
          %v368 = vpop.f32.mrb[0].mxu0
          %v369 = vadd.f32 %v270, %v368
          %v370 = vpop.f32.mrb[0].mxu0
          %371 = vmatprep.mubr.f32.mxu0 0.0
          %372 = vmatmul.mubr.f32.gmra.mrb[0].mxu0 %v248
          %v373 = vpop.f32.mrb[0].mxu0
          %v374 = vadd.f32 %v270, %v373
          %v375 = vpop.f32.mrb[0].mxu0
          %376 = vdwg.mxu0
          %377 = vst [vmem:[#allocation2] sm:$0xff] %v339
          %378 = vst [vmem:[#allocation2 + $0x8] sm:$0xff] %v344
          %379 = vst [vmem:[#allocation2 + $0x10] sm:$0xff] %v349
          %380 = vst [vmem:[#allocation2 + $0x18] sm:$0xff] %v354
          %381 = vst [vmem:[#allocation2 + $0x20] sm:$0xff] %v359
          %382 = vst [vmem:[#allocation2 + $0x28] sm:$0xff] %v364
          %383 = vst [vmem:[#allocation2 + $0x30] sm:$0xff] %v369
          %384 = vst [vmem:[#allocation2 + $0x38] sm:$0xff] %v374
        $region44: #{_lambda_.1} parent=35 // pred_fallthru
          _
        %p385 = scmp.gt.s32.totalorder %s18, 0
        // Predicated region
        $region45: #{_lambda_.1} parent=35 // pred_check
          %p386 = pneg %p385
        $region46: #{_lambda_.1} parent=35 // pred_check_branch
          %388 = sbr.rel (%p386) target = $region48
        $region47: #{_lambda_.1} parent=35 // pred_region
          %v389 = vld [vmem:[%s4] sm:$0xff]
          %v390 = vld [vmem:[%s4 + $0x8] sm:$0xff]
          %v391 = vld [vmem:[%s4 + $0x10] sm:$0xff]
          %v392 = vld [vmem:[%s4 + $0x18] sm:$0xff]
          %v393 = vld [vmem:[%s4 + $0x20] sm:$0xff]
          %v394 = vld [vmem:[%s4 + $0x28] sm:$0xff]
          %v395 = vld [vmem:[%s4 + $0x30] sm:$0xff]
          %v396 = vld [vmem:[%s4 + $0x38] sm:$0xff]
          %v397 = vld [vmem:[%s201] sm:$0xff]
          %v398 = vld [vmem:[%s201 + $0x8] sm:$0xff]
          %v399 = vld [vmem:[%s201 + $0x10] sm:$0xff]
          %v400 = vld [vmem:[%s201 + $0x18] sm:$0xff]
          %v401 = vld [vmem:[%s236] sm:$0x1]
          %v403 = vlaneseq
          %v404 = vshrl.u32 %v403, 7
          %v405 = vsub.s32 0, %v404
          %v406 = vrot.slane %v401, %v405
          %vm408 = vcmask 261120
          %v410 = vsel %vm408, %v389, 0
          %v413 = vsel %vm408, %v390, 0
          %v416 = vsel %vm408, %v391, 0
          %v419 = vsel %vm408, %v392, 0
          %v422 = vsel %vm408, %v393, 0
          %v425 = vsel %vm408, %v394, 0
          %v428 = vsel %vm408, %v395, 0
          %v431 = vsel %vm408, %v396, 0
          %433 = vmatprep.subr.mxu0 0.0
          %434 = vmatpush1.msra.mxu0 %v397
          %435 = vmatprep.subr.mxu0 0.0
          %436 = vmatpush1.msra.mxu0 %v398
          %437 = vmatprep.subr.mxu0 0.0
          %438 = vmatpush1.msra.mxu0 %v399
          %439 = vmatprep.subr.mxu0 0.0
          %440 = vmatpush1.msra.mxu0 %v400
          %441 = vmatprep.subr.mxu0 0.0
          %442 = vmatpush1.msra.mxu0 0.0
          %443 = vmatprep.subr.mxu0 0.0
          %444 = vmatpush1.msra.mxu0 0.0
          %445 = vmatprep.subr.mxu0 0.0
          %446 = vmatpush1.msra.mxu0 0.0
          %447 = vmatprep.subr.mxu0 0.0
          %448 = vmatpush1.msra.mxu0 0.0
          %449 = vmatprep.subr.mxu0 0.0
          %450 = vmatpush1.msra.mxu0 0.0
          %451 = vmatprep.subr.mxu0 0.0
          %452 = vmatpush1.msra.mxu0 0.0
          %453 = vmatprep.subr.mxu0 0.0
          %454 = vmatpush1.msra.mxu0 0.0
          %455 = vmatprep.subr.mxu0 0.0
          %456 = vmatpush1.msra.mxu0 0.0
          %457 = vmatprep.subr.mxu0 0.0
          %458 = vmatpush1.msra.mxu0 0.0
          %459 = vmatprep.subr.mxu0 0.0
          %460 = vmatpush1.msra.mxu0 0.0
          %461 = vmatprep.subr.mxu0 0.0
          %462 = vmatpush1.msra.mxu0 0.0
          %463 = vmatprep.subr.mxu0 0.0
          %464 = vmatpush1.msra.mxu0 0.0
          %465 = vmatprep.subr.mxu0 0.0
          %466 = vmatpush1.msra.mxu0 0.0
          %467 = vmatprep.subr.mxu0 0.0
          %468 = vmatpush1.msra.mxu0 0.0
          %469 = vmatprep.subr.mxu0 0.0
          %470 = vmatpush1.msra.mxu0 0.0
          %471 = vmatprep.subr.mxu0 0.0
          %472 = vmatpush1.msra.mxu0 0.0
          %473 = vmatprep.subr.mxu0 0.0
          %474 = vmatpush1.msra.mxu0 0.0
          %475 = vmatprep.subr.mxu0 0.0
          %476 = vmatpush1.msra.mxu0 0.0
          %477 = vmatprep.subr.mxu0 0.0
          %478 = vmatpush1.msra.mxu0 0.0
          %479 = vmatprep.subr.mxu0 0.0
          %480 = vmatpush1.msra.mxu0 0.0
          %481 = vmatprep.subr.mxu0 0.0
          %482 = vmatpush1.msra.mxu0 0.0
          %483 = vmatprep.subr.mxu0 0.0
          %484 = vmatpush1.msra.mxu0 0.0
          %485 = vmatprep.subr.mxu0 0.0
          %486 = vmatpush1.msra.mxu0 0.0
          %487 = vmatprep.subr.mxu0 0.0
          %488 = vmatpush1.msra.mxu0 0.0
          %489 = vmatprep.subr.mxu0 0.0
          %490 = vmatpush1.msra.mxu0 0.0
          %491 = vmatprep.subr.mxu0 0.0
          %492 = vmatpush1.msra.mxu0 0.0
          %493 = vmatprep.subr.mxu0 0.0
          %494 = vmatpush1.msra.mxu0 0.0
          %495 = vmatprep.subr.mxu0 0.0
          %496 = vmatpush1.msra.mxu0 0.0
          %497 = vmatprep.mubr.f32.mxu0 0.0
          %498 = vmatmul.mubr.f32.gmra.mrb[0].mxu0 %v410
          %v499 = vpop.f32.mrb[0].mxu0
          %v500 = vadd.f32 %v406, %v499
          %v501 = vpop.f32.mrb[0].mxu0
          %502 = vmatprep.mubr.f32.mxu0 0.0
          %503 = vmatmul.mubr.f32.gmra.mrb[0].mxu0 %v413
          %v504 = vpop.f32.mrb[0].mxu0
          %v505 = vadd.f32 %v406, %v504
          %v506 = vpop.f32.mrb[0].mxu0
          %507 = vmatprep.mubr.f32.mxu0 0.0
          %508 = vmatmul.mubr.f32.gmra.mrb[0].mxu0 %v416
          %v509 = vpop.f32.mrb[0].mxu0
          %v510 = vadd.f32 %v406, %v509
          %v511 = vpop.f32.mrb[0].mxu0
          %512 = vmatprep.mubr.f32.mxu0 0.0
          %513 = vmatmul.mubr.f32.gmra.mrb[0].mxu0 %v419
          %v514 = vpop.f32.mrb[0].mxu0
          %v515 = vadd.f32 %v406, %v514
          %v516 = vpop.f32.mrb[0].mxu0
          %517 = vmatprep.mubr.f32.mxu0 0.0
          %518 = vmatmul.mubr.f32.gmra.mrb[0].mxu0 %v422
          %v519 = vpop.f32.mrb[0].mxu0
          %v520 = vadd.f32 %v406, %v519
          %v521 = vpop.f32.mrb[0].mxu0
          %522 = vmatprep.mubr.f32.mxu0 0.0
          %523 = vmatmul.mubr.f32.gmra.mrb[0].mxu0 %v425
          %v524 = vpop.f32.mrb[0].mxu0
          %v525 = vadd.f32 %v406, %v524
          %v526 = vpop.f32.mrb[0].mxu0
          %527 = vmatprep.mubr.f32.mxu0 0.0
          %528 = vmatmul.mubr.f32.gmra.mrb[0].mxu0 %v428
          %v529 = vpop.f32.mrb[0].mxu0
          %v530 = vadd.f32 %v406, %v529
          %v531 = vpop.f32.mrb[0].mxu0
          %532 = vmatprep.mubr.f32.mxu0 0.0
          %533 = vmatmul.mubr.f32.gmra.mrb[0].mxu0 %v431
          %v534 = vpop.f32.mrb[0].mxu0
          %v535 = vadd.f32 %v406, %v534
          %v536 = vpop.f32.mrb[0].mxu0
          %537 = vdwg.mxu0
          %538 = vst [vmem:[#allocation2] sm:$0xff] %v500
          %539 = vst [vmem:[#allocation2 + $0x8] sm:$0xff] %v505
          %540 = vst [vmem:[#allocation2 + $0x10] sm:$0xff] %v510
          %541 = vst [vmem:[#allocation2 + $0x18] sm:$0xff] %v515
          %542 = vst [vmem:[#allocation2 + $0x20] sm:$0xff] %v520
          %543 = vst [vmem:[#allocation2 + $0x28] sm:$0xff] %v525
          %544 = vst [vmem:[#allocation2 + $0x30] sm:$0xff] %v530
          %545 = vst [vmem:[#allocation2 + $0x38] sm:$0xff] %v535
        $region48: #{_lambda_.1} parent=35 // pred_fallthru
          _
        %v546 = vld [vmem:[%s233] sm:$0xff]
        %v547 = vld [vmem:[%s233 + $0x8] sm:$0xff]
        %v548 = vld [vmem:[%s233 + $0x10] sm:$0xff]
        %v549 = vld [vmem:[%s233 + $0x18] sm:$0xff]
        %v550 = vld [vmem:[#allocation2] sm:$0xff]
        %vm551 = vcmask 261120
        %v553 = vsel %vm551, 0.0, 0
        %555 = vmatprep.subr.mxu0 0.0
        %556 = vmatpush1.msra.mxu0 %v546
        %557 = vmatprep.subr.mxu0 0.0
        %558 = vmatpush1.msra.mxu0 %v547
        %559 = vmatprep.subr.mxu0 0.0
        %560 = vmatpush1.msra.mxu0 %v548
        %561 = vmatprep.subr.mxu0 0.0
        %562 = vmatpush1.msra.mxu0 %v549
        %563 = vmatprep.subr.mxu0 0.0
        %564 = vmatpush1.msra.mxu0 0.0
        %565 = vmatprep.subr.mxu0 0.0
        %566 = vmatpush1.msra.mxu0 0.0
        %567 = vmatprep.subr.mxu0 0.0
        %568 = vmatpush1.msra.mxu0 0.0
        %569 = vmatprep.subr.mxu0 0.0
        %570 = vmatpush1.msra.mxu0 0.0
        %571 = vmatprep.subr.mxu0 0.0
        %572 = vmatpush1.msra.mxu0 0.0
        %573 = vmatprep.subr.mxu0 0.0
        %574 = vmatpush1.msra.mxu0 0.0
        %575 = vmatprep.subr.mxu0 0.0
        %576 = vmatpush1.msra.mxu0 0.0
        %577 = vmatprep.subr.mxu0 0.0
        %578 = vmatpush1.msra.mxu0 0.0
        %579 = vmatprep.subr.mxu0 0.0
        %580 = vmatpush1.msra.mxu0 0.0
        %581 = vmatprep.subr.mxu0 0.0
        %582 = vmatpush1.msra.mxu0 0.0
        %583 = vmatprep.subr.mxu0 0.0
        %584 = vmatpush1.msra.mxu0 0.0
        %585 = vmatprep.subr.mxu0 0.0
        %586 = vmatpush1.msra.mxu0 0.0
        %587 = vmatprep.subr.mxu0 0.0
        %588 = vmatpush1.msra.mxu0 0.0
        %589 = vmatprep.subr.mxu0 0.0
        %590 = vmatpush1.msra.mxu0 0.0
        %591 = vmatprep.subr.mxu0 0.0
        %592 = vmatpush1.msra.mxu0 0.0
        %593 = vmatprep.subr.mxu0 0.0
        %594 = vmatpush1.msra.mxu0 0.0
        %595 = vmatprep.subr.mxu0 0.0
        %596 = vmatpush1.msra.mxu0 0.0
        %597 = vmatprep.subr.mxu0 0.0
        %598 = vmatpush1.msra.mxu0 0.0
        %599 = vmatprep.subr.mxu0 0.0
        %600 = vmatpush1.msra.mxu0 0.0
        %601 = vmatprep.subr.mxu0 0.0
        %602 = vmatpush1.msra.mxu0 0.0
        %603 = vmatprep.subr.mxu0 0.0
        %604 = vmatpush1.msra.mxu0 0.0
        %605 = vmatprep.subr.mxu0 0.0
        %606 = vmatpush1.msra.mxu0 0.0
        %607 = vmatprep.subr.mxu0 0.0
        %608 = vmatpush1.msra.mxu0 0.0
        %609 = vmatprep.subr.mxu0 0.0
        %610 = vmatpush1.msra.mxu0 0.0
        %611 = vmatprep.subr.mxu0 0.0
        %612 = vmatpush1.msra.mxu0 0.0
        %613 = vmatprep.subr.mxu0 0.0
        %614 = vmatpush1.msra.mxu0 0.0
        %615 = vmatprep.subr.mxu0 0.0
        %616 = vmatpush1.msra.mxu0 0.0
        %617 = vmatprep.subr.mxu0 0.0
        %618 = vmatpush1.msra.mxu0 0.0
        %619 = vmatprep.mubr.f32.mxu0 0.0
        %620 = vmatmul.mubr.f32.gmra.mrb[0].mxu0 %v553
        %v621 = vpop.f32.mrb[0].mxu0
        %v622 = vadd.f32 0.0, %v621
        %v623 = vpop.f32.mrb[0].mxu0
        %624 = vdwg.mxu0
        %v625 = vadd.f32 %v550, %v622
        %v626 = vxor.u32 %v625, 2147483648
        %v627 = vmul.f32 %v626, 1.442695
        %v628 = vpow.pop %v627
        %v629 = vadd.f32 %v628, 1.0
        %v630 = vrcp.pop %v629
        %v631 = vmul.f32 1.0, %v630
        %v632 = vtanh.pop %v625
        %v633 = vmul.f32 %v631, 0.0
        %635 = vrot.lane.b32.xlu0 %v632, 64
        %v636 = vpop.permute.xlu0 %635
        %v638 = vmul.f32 %v631, %v636
        %640 = vrot.lane.b32.xlu0 %v638, 32
        %v641 = vpop.permute.xlu0 %640
        %v643 = vadd.f32 %v633, %v641
        %v644 = vtanh.pop %v643
        %646 = vrot.lane.b32.xlu0 %v644, 64
        %v647 = vpop.permute.xlu0 %646
        %v649 = vmul.f32 %v631, %v647
        %651 = vrot.lane.b32.xlu0 %v649, 32
        %v652 = vpop.permute.xlu0 %651
        %654 = vst.msk [vmem:[%s4] sm:$0xff] %vm551, %v652
        %s655 = scalar_lea.vmem [#allocation2], 8
        %v656 = vld [vmem:[%s655] sm:$0xff]
        %v657 = vsel %vm551, %v652, 0
        %659 = vmatprep.subr.mxu0 0.0
        %660 = vmatpush1.msra.mxu0 %v546
        %661 = vmatprep.subr.mxu0 0.0
        %662 = vmatpush1.msra.mxu0 %v547
        %663 = vmatprep.subr.mxu0 0.0
        %664 = vmatpush1.msra.mxu0 %v548
        %665 = vmatprep.subr.mxu0 0.0
        %666 = vmatpush1.msra.mxu0 %v549
        %667 = vmatprep.subr.mxu0 0.0
        %668 = vmatpush1.msra.mxu0 0.0
        %669 = vmatprep.subr.mxu0 0.0
        %670 = vmatpush1.msra.mxu0 0.0
        %671 = vmatprep.subr.mxu0 0.0
        %672 = vmatpush1.msra.mxu0 0.0
        %673 = vmatprep.subr.mxu0 0.0
        %674 = vmatpush1.msra.mxu0 0.0
        %675 = vmatprep.subr.mxu0 0.0
        %676 = vmatpush1.msra.mxu0 0.0
        %677 = vmatprep.subr.mxu0 0.0
        %678 = vmatpush1.msra.mxu0 0.0
        %679 = vmatprep.subr.mxu0 0.0
        %680 = vmatpush1.msra.mxu0 0.0
        %681 = vmatprep.subr.mxu0 0.0
        %682 = vmatpush1.msra.mxu0 0.0
        %683 = vmatprep.subr.mxu0 0.0
        %684 = vmatpush1.msra.mxu0 0.0
        %685 = vmatprep.subr.mxu0 0.0
        %686 = vmatpush1.msra.mxu0 0.0
        %687 = vmatprep.subr.mxu0 0.0
        %688 = vmatpush1.msra.mxu0 0.0
        %689 = vmatprep.subr.mxu0 0.0
        %690 = vmatpush1.msra.mxu0 0.0
        %691 = vmatprep.subr.mxu0 0.0
        %692 = vmatpush1.msra.mxu0 0.0
        %693 = vmatprep.subr.mxu0 0.0
        %694 = vmatpush1.msra.mxu0 0.0
        %695 = vmatprep.subr.mxu0 0.0
        %696 = vmatpush1.msra.mxu0 0.0
        %697 = vmatprep.subr.mxu0 0.0
        %698 = vmatpush1.msra.mxu0 0.0
        %699 = vmatprep.subr.mxu0 0.0
        %700 = vmatpush1.msra.mxu0 0.0
        %701 = vmatprep.subr.mxu0 0.0
        %702 = vmatpush1.msra.mxu0 0.0
        %703 = vmatprep.subr.mxu0 0.0
        %704 = vmatpush1.msra.mxu0 0.0
        %705 = vmatprep.subr.mxu0 0.0
        %706 = vmatpush1.msra.mxu0 0.0
        %707 = vmatprep.subr.mxu0 0.0
        %708 = vmatpush1.msra.mxu0 0.0
        %709 = vmatprep.subr.mxu0 0.0
        %710 = vmatpush1.msra.mxu0 0.0
        %711 = vmatprep.subr.mxu0 0.0
        %712 = vmatpush1.msra.mxu0 0.0
        %713 = vmatprep.subr.mxu0 0.0
        %714 = vmatpush1.msra.mxu0 0.0
        %715 = vmatprep.subr.mxu0 0.0
        %716 = vmatpush1.msra.mxu0 0.0
        %717 = vmatprep.subr.mxu0 0.0
        %718 = vmatpush1.msra.mxu0 0.0
        %719 = vmatprep.subr.mxu0 0.0
        %720 = vmatpush1.msra.mxu0 0.0
        %721 = vmatprep.subr.mxu0 0.0
        %722 = vmatpush1.msra.mxu0 0.0
        %723 = vmatprep.mubr.f32.mxu0 0.0
        %724 = vmatmul.mubr.f32.gmra.mrb[0].mxu0 %v657
        %v725 = vpop.f32.mrb[0].mxu0
        %v726 = vadd.f32 0.0, %v725
        %v727 = vpop.f32.mrb[0].mxu0
        %728 = vdwg.mxu0
        %v729 = vadd.f32 %v656, %v726
        %v730 = vxor.u32 %v729, 2147483648
        %v731 = vmul.f32 %v730, 1.442695
        %v732 = vpow.pop %v731
        %v733 = vadd.f32 %v732, 1.0
        %v734 = vrcp.pop %v733
        %v735 = vmul.f32 1.0, %v734
        %v736 = vtanh.pop %v729
        %v737 = vmul.f32 %v735, %v643
        %739 = vrot.lane.b32.xlu0 %v736, 64
        %v740 = vpop.permute.xlu0 %739
        %v742 = vmul.f32 %v735, %v740
        %744 = vrot.lane.b32.xlu0 %v742, 32
        %v745 = vpop.permute.xlu0 %744
        %v747 = vadd.f32 %v737, %v745
        %v748 = vtanh.pop %v747
        %750 = vrot.lane.b32.xlu0 %v748, 64
        %v751 = vpop.permute.xlu0 %750
        %v753 = vmul.f32 %v735, %v751
        %755 = vrot.lane.b32.xlu0 %v753, 32
        %v756 = vpop.permute.xlu0 %755
        %s758 = scalar_lea.vmem %s4, 8
        %759 = vst.msk [vmem:[%s758] sm:$0xff] %vm551, %v756
        %s760 = scalar_lea.vmem [#allocation2], 16
        %v761 = vld [vmem:[%s760] sm:$0xff]
        %v762 = vsel %vm551, %v756, 0
        %764 = vmatprep.subr.mxu0 0.0
        %765 = vmatpush1.msra.mxu0 %v546
        %766 = vmatprep.subr.mxu0 0.0
        %767 = vmatpush1.msra.mxu0 %v547
        %768 = vmatprep.subr.mxu0 0.0
        %769 = vmatpush1.msra.mxu0 %v548
        %770 = vmatprep.subr.mxu0 0.0
        %771 = vmatpush1.msra.mxu0 %v549
        %772 = vmatprep.subr.mxu0 0.0
        %773 = vmatpush1.msra.mxu0 0.0
        %774 = vmatprep.subr.mxu0 0.0
        %775 = vmatpush1.msra.mxu0 0.0
        %776 = vmatprep.subr.mxu0 0.0
        %777 = vmatpush1.msra.mxu0 0.0
        %778 = vmatprep.subr.mxu0 0.0
        %779 = vmatpush1.msra.mxu0 0.0
        %780 = vmatprep.subr.mxu0 0.0
        %781 = vmatpush1.msra.mxu0 0.0
        %782 = vmatprep.subr.mxu0 0.0
        %783 = vmatpush1.msra.mxu0 0.0
        %784 = vmatprep.subr.mxu0 0.0
        %785 = vmatpush1.msra.mxu0 0.0
        %786 = vmatprep.subr.mxu0 0.0
        %787 = vmatpush1.msra.mxu0 0.0
        %788 = vmatprep.subr.mxu0 0.0
        %789 = vmatpush1.msra.mxu0 0.0
        %790 = vmatprep.subr.mxu0 0.0
        %791 = vmatpush1.msra.mxu0 0.0
        %792 = vmatprep.subr.mxu0 0.0
        %793 = vmatpush1.msra.mxu0 0.0
        %794 = vmatprep.subr.mxu0 0.0
        %795 = vmatpush1.msra.mxu0 0.0
        %796 = vmatprep.subr.mxu0 0.0
        %797 = vmatpush1.msra.mxu0 0.0
        %798 = vmatprep.subr.mxu0 0.0
        %799 = vmatpush1.msra.mxu0 0.0
        %800 = vmatprep.subr.mxu0 0.0
        %801 = vmatpush1.msra.mxu0 0.0
        %802 = vmatprep.subr.mxu0 0.0
        %803 = vmatpush1.msra.mxu0 0.0
        %804 = vmatprep.subr.mxu0 0.0
        %805 = vmatpush1.msra.mxu0 0.0
        %806 = vmatprep.subr.mxu0 0.0
        %807 = vmatpush1.msra.mxu0 0.0
        %808 = vmatprep.subr.mxu0 0.0
        %809 = vmatpush1.msra.mxu0 0.0
        %810 = vmatprep.subr.mxu0 0.0
        %811 = vmatpush1.msra.mxu0 0.0
        %812 = vmatprep.subr.mxu0 0.0
        %813 = vmatpush1.msra.mxu0 0.0
        %814 = vmatprep.subr.mxu0 0.0
        %815 = vmatpush1.msra.mxu0 0.0
        %816 = vmatprep.subr.mxu0 0.0
        %817 = vmatpush1.msra.mxu0 0.0
        %818 = vmatprep.subr.mxu0 0.0
        %819 = vmatpush1.msra.mxu0 0.0
        %820 = vmatprep.subr.mxu0 0.0
        %821 = vmatpush1.msra.mxu0 0.0
        %822 = vmatprep.subr.mxu0 0.0
        %823 = vmatpush1.msra.mxu0 0.0
        %824 = vmatprep.subr.mxu0 0.0
        %825 = vmatpush1.msra.mxu0 0.0
        %826 = vmatprep.subr.mxu0 0.0
        %827 = vmatpush1.msra.mxu0 0.0
        %828 = vmatprep.mubr.f32.mxu0 0.0
        %829 = vmatmul.mubr.f32.gmra.mrb[0].mxu0 %v762
        %v830 = vpop.f32.mrb[0].mxu0
        %v831 = vadd.f32 0.0, %v830
        %v832 = vpop.f32.mrb[0].mxu0
        %833 = vdwg.mxu0
        %v834 = vadd.f32 %v761, %v831
        %v835 = vxor.u32 %v834, 2147483648
        %v836 = vmul.f32 %v835, 1.442695
        %v837 = vpow.pop %v836
        %v838 = vadd.f32 %v837, 1.0
        %v839 = vrcp.pop %v838
        %v840 = vmul.f32 1.0, %v839
        %v841 = vtanh.pop %v834
        %v842 = vmul.f32 %v840, %v747
        %844 = vrot.lane.b32.xlu0 %v841, 64
        %v845 = vpop.permute.xlu0 %844
        %v847 = vmul.f32 %v840, %v845
        %849 = vrot.lane.b32.xlu0 %v847, 32
        %v850 = vpop.permute.xlu0 %849
        %v852 = vadd.f32 %v842, %v850
        %v853 = vtanh.pop %v852
        %855 = vrot.lane.b32.xlu0 %v853, 64
        %v856 = vpop.permute.xlu0 %855
        %v858 = vmul.f32 %v840, %v856
        %860 = vrot.lane.b32.xlu0 %v858, 32
        %v861 = vpop.permute.xlu0 %860
        %s863 = scalar_lea.vmem %s4, 16
        %864 = vst.msk [vmem:[%s863] sm:$0xff] %vm551, %v861
        %s865 = scalar_lea.vmem [#allocation2], 24
        %v866 = vld [vmem:[%s865] sm:$0xff]
        %v867 = vsel %vm551, %v861, 0
        %869 = vmatprep.subr.mxu0 0.0
        %870 = vmatpush1.msra.mxu0 %v546
        %871 = vmatprep.subr.mxu0 0.0
        %872 = vmatpush1.msra.mxu0 %v547
        %873 = vmatprep.subr.mxu0 0.0
        %874 = vmatpush1.msra.mxu0 %v548
        %875 = vmatprep.subr.mxu0 0.0
        %876 = vmatpush1.msra.mxu0 %v549
        %877 = vmatprep.subr.mxu0 0.0
        %878 = vmatpush1.msra.mxu0 0.0
        %879 = vmatprep.subr.mxu0 0.0
        %880 = vmatpush1.msra.mxu0 0.0
        %881 = vmatprep.subr.mxu0 0.0
        %882 = vmatpush1.msra.mxu0 0.0
        %883 = vmatprep.subr.mxu0 0.0
        %884 = vmatpush1.msra.mxu0 0.0
        %885 = vmatprep.subr.mxu0 0.0
        %886 = vmatpush1.msra.mxu0 0.0
        %887 = vmatprep.subr.mxu0 0.0
        %888 = vmatpush1.msra.mxu0 0.0
        %889 = vmatprep.subr.mxu0 0.0
        %890 = vmatpush1.msra.mxu0 0.0
        %891 = vmatprep.subr.mxu0 0.0
        %892 = vmatpush1.msra.mxu0 0.0
        %893 = vmatprep.subr.mxu0 0.0
        %894 = vmatpush1.msra.mxu0 0.0
        %895 = vmatprep.subr.mxu0 0.0
        %896 = vmatpush1.msra.mxu0 0.0
        %897 = vmatprep.subr.mxu0 0.0
        %898 = vmatpush1.msra.mxu0 0.0
        %899 = vmatprep.subr.mxu0 0.0
        %900 = vmatpush1.msra.mxu0 0.0
        %901 = vmatprep.subr.mxu0 0.0
        %902 = vmatpush1.msra.mxu0 0.0
        %903 = vmatprep.subr.mxu0 0.0
        %904 = vmatpush1.msra.mxu0 0.0
        %905 = vmatprep.subr.mxu0 0.0
        %906 = vmatpush1.msra.mxu0 0.0
        %907 = vmatprep.subr.mxu0 0.0
        %908 = vmatpush1.msra.mxu0 0.0
        %909 = vmatprep.subr.mxu0 0.0
        %910 = vmatpush1.msra.mxu0 0.0
        %911 = vmatprep.subr.mxu0 0.0
        %912 = vmatpush1.msra.mxu0 0.0
        %913 = vmatprep.subr.mxu0 0.0
        %914 = vmatpush1.msra.mxu0 0.0
        %915 = vmatprep.subr.mxu0 0.0
        %916 = vmatpush1.msra.mxu0 0.0
        %917 = vmatprep.subr.mxu0 0.0
        %918 = vmatpush1.msra.mxu0 0.0
        %919 = vmatprep.subr.mxu0 0.0
        %920 = vmatpush1.msra.mxu0 0.0
        %921 = vmatprep.subr.mxu0 0.0
        %922 = vmatpush1.msra.mxu0 0.0
        %923 = vmatprep.subr.mxu0 0.0
        %924 = vmatpush1.msra.mxu0 0.0
        %925 = vmatprep.subr.mxu0 0.0
        %926 = vmatpush1.msra.mxu0 0.0
        %927 = vmatprep.subr.mxu0 0.0
        %928 = vmatpush1.msra.mxu0 0.0
        %929 = vmatprep.subr.mxu0 0.0
        %930 = vmatpush1.msra.mxu0 0.0
        %931 = vmatprep.subr.mxu0 0.0
        %932 = vmatpush1.msra.mxu0 0.0
        %933 = vmatprep.mubr.f32.mxu0 0.0
        %934 = vmatmul.mubr.f32.gmra.mrb[0].mxu0 %v867
        %v935 = vpop.f32.mrb[0].mxu0
        %v936 = vadd.f32 0.0, %v935
        %v937 = vpop.f32.mrb[0].mxu0
        %938 = vdwg.mxu0
        %v939 = vadd.f32 %v866, %v936
        %v940 = vxor.u32 %v939, 2147483648
        %v941 = vmul.f32 %v940, 1.442695
        %v942 = vpow.pop %v941
        %v943 = vadd.f32 %v942, 1.0
        %v944 = vrcp.pop %v943
        %v945 = vmul.f32 1.0, %v944
        %v946 = vtanh.pop %v939
        %v947 = vmul.f32 %v945, %v852
        %949 = vrot.lane.b32.xlu0 %v946, 64
        %v950 = vpop.permute.xlu0 %949
        %v952 = vmul.f32 %v945, %v950
        %954 = vrot.lane.b32.xlu0 %v952, 32
        %v955 = vpop.permute.xlu0 %954
        %v957 = vadd.f32 %v947, %v955
        %v958 = vtanh.pop %v957
        %960 = vrot.lane.b32.xlu0 %v958, 64
        %v961 = vpop.permute.xlu0 %960
        %v963 = vmul.f32 %v945, %v961
        %965 = vrot.lane.b32.xlu0 %v963, 32
        %v966 = vpop.permute.xlu0 %965
        %s968 = scalar_lea.vmem %s4, 24
        %969 = vst.msk [vmem:[%s968] sm:$0xff] %vm551, %v966
        %s970 = scalar_lea.vmem [#allocation2], 32
        %v971 = vld [vmem:[%s970] sm:$0xff]
        %v972 = vsel %vm551, %v966, 0
        %974 = vmatprep.subr.mxu0 0.0
        %975 = vmatpush1.msra.mxu0 %v546
        %976 = vmatprep.subr.mxu0 0.0
        %977 = vmatpush1.msra.mxu0 %v547
        %978 = vmatprep.subr.mxu0 0.0
        %979 = vmatpush1.msra.mxu0 %v548
        %980 = vmatprep.subr.mxu0 0.0
        %981 = vmatpush1.msra.mxu0 %v549
        %982 = vmatprep.subr.mxu0 0.0
        %983 = vmatpush1.msra.mxu0 0.0
        %984 = vmatprep.subr.mxu0 0.0
        %985 = vmatpush1.msra.mxu0 0.0
        %986 = vmatprep.subr.mxu0 0.0
        %987 = vmatpush1.msra.mxu0 0.0
        %988 = vmatprep.subr.mxu0 0.0
        %989 = vmatpush1.msra.mxu0 0.0
        %990 = vmatprep.subr.mxu0 0.0
        %991 = vmatpush1.msra.mxu0 0.0
        %992 = vmatprep.subr.mxu0 0.0
        %993 = vmatpush1.msra.mxu0 0.0
        %994 = vmatprep.subr.mxu0 0.0
        %995 = vmatpush1.msra.mxu0 0.0
        %996 = vmatprep.subr.mxu0 0.0
        %997 = vmatpush1.msra.mxu0 0.0
        %998 = vmatprep.subr.mxu0 0.0
        %999 = vmatpush1.msra.mxu0 0.0
        %1000 = vmatprep.subr.mxu0 0.0
        %1001 = vmatpush1.msra.mxu0 0.0
        %1002 = vmatprep.subr.mxu0 0.0
        %1003 = vmatpush1.msra.mxu0 0.0
        %1004 = vmatprep.subr.mxu0 0.0
        %1005 = vmatpush1.msra.mxu0 0.0
        %1006 = vmatprep.subr.mxu0 0.0
        %1007 = vmatpush1.msra.mxu0 0.0
        %1008 = vmatprep.subr.mxu0 0.0
        %1009 = vmatpush1.msra.mxu0 0.0
        %1010 = vmatprep.subr.mxu0 0.0
        %1011 = vmatpush1.msra.mxu0 0.0
        %1012 = vmatprep.subr.mxu0 0.0
        %1013 = vmatpush1.msra.mxu0 0.0
        %1014 = vmatprep.subr.mxu0 0.0
        %1015 = vmatpush1.msra.mxu0 0.0
        %1016 = vmatprep.subr.mxu0 0.0
        %1017 = vmatpush1.msra.mxu0 0.0
        %1018 = vmatprep.subr.mxu0 0.0
        %1019 = vmatpush1.msra.mxu0 0.0
        %1020 = vmatprep.subr.mxu0 0.0
        %1021 = vmatpush1.msra.mxu0 0.0
        %1022 = vmatprep.subr.mxu0 0.0
        %1023 = vmatpush1.msra.mxu0 0.0
        %1024 = vmatprep.subr.mxu0 0.0
        %1025 = vmatpush1.msra.mxu0 0.0
        %1026 = vmatprep.subr.mxu0 0.0
        %1027 = vmatpush1.msra.mxu0 0.0
        %1028 = vmatprep.subr.mxu0 0.0
        %1029 = vmatpush1.msra.mxu0 0.0
        %1030 = vmatprep.subr.mxu0 0.0
        %1031 = vmatpush1.msra.mxu0 0.0
        %1032 = vmatprep.subr.mxu0 0.0
        %1033 = vmatpush1.msra.mxu0 0.0
        %1034 = vmatprep.subr.mxu0 0.0
        %1035 = vmatpush1.msra.mxu0 0.0
        %1036 = vmatprep.subr.mxu0 0.0
        %1037 = vmatpush1.msra.mxu0 0.0
        %1038 = vmatprep.mubr.f32.mxu0 0.0
        %1039 = vmatmul.mubr.f32.gmra.mrb[0].mxu0 %v972
        %v1040 = vpop.f32.mrb[0].mxu0
        %v1041 = vadd.f32 0.0, %v1040
        %v1042 = vpop.f32.mrb[0].mxu0
        %1043 = vdwg.mxu0
        %v1044 = vadd.f32 %v971, %v1041
        %v1045 = vxor.u32 %v1044, 2147483648
        %v1046 = vmul.f32 %v1045, 1.442695
        %v1047 = vpow.pop %v1046
        %v1048 = vadd.f32 %v1047, 1.0
        %v1049 = vrcp.pop %v1048
        %v1050 = vmul.f32 1.0, %v1049
        %v1051 = vtanh.pop %v1044
        %v1052 = vmul.f32 %v1050, %v957
        %1054 = vrot.lane.b32.xlu0 %v1051, 64
        %v1055 = vpop.permute.xlu0 %1054
        %v1057 = vmul.f32 %v1050, %v1055
        %1059 = vrot.lane.b32.xlu0 %v1057, 32
        %v1060 = vpop.permute.xlu0 %1059
        %v1062 = vadd.f32 %v1052, %v1060
        %v1063 = vtanh.pop %v1062
        %1065 = vrot.lane.b32.xlu0 %v1063, 64
        %v1066 = vpop.permute.xlu0 %1065
        %v1068 = vmul.f32 %v1050, %v1066
        %1070 = vrot.lane.b32.xlu0 %v1068, 32
        %v1071 = vpop.permute.xlu0 %1070
        %s1073 = scalar_lea.vmem %s4, 32
        %1074 = vst.msk [vmem:[%s1073] sm:$0xff] %vm551, %v1071
        %s1075 = scalar_lea.vmem [#allocation2], 40
        %v1076 = vld [vmem:[%s1075] sm:$0xff]
        %v1077 = vsel %vm551, %v1071, 0
        %1079 = vmatprep.subr.mxu0 0.0
        %1080 = vmatpush1.msra.mxu0 %v546
        %1081 = vmatprep.subr.mxu0 0.0
        %1082 = vmatpush1.msra.mxu0 %v547
        %1083 = vmatprep.subr.mxu0 0.0
        %1084 = vmatpush1.msra.mxu0 %v548
        %1085 = vmatprep.subr.mxu0 0.0
        %1086 = vmatpush1.msra.mxu0 %v549
        %1087 = vmatprep.subr.mxu0 0.0
        %1088 = vmatpush1.msra.mxu0 0.0
        %1089 = vmatprep.subr.mxu0 0.0
        %1090 = vmatpush1.msra.mxu0 0.0
        %1091 = vmatprep.subr.mxu0 0.0
        %1092 = vmatpush1.msra.mxu0 0.0
        %1093 = vmatprep.subr.mxu0 0.0
        %1094 = vmatpush1.msra.mxu0 0.0
        %1095 = vmatprep.subr.mxu0 0.0
        %1096 = vmatpush1.msra.mxu0 0.0
        %1097 = vmatprep.subr.mxu0 0.0
        %1098 = vmatpush1.msra.mxu0 0.0
        %1099 = vmatprep.subr.mxu0 0.0
        %1100 = vmatpush1.msra.mxu0 0.0
        %1101 = vmatprep.subr.mxu0 0.0
        %1102 = vmatpush1.msra.mxu0 0.0
        %1103 = vmatprep.subr.mxu0 0.0
        %1104 = vmatpush1.msra.mxu0 0.0
        %1105 = vmatprep.subr.mxu0 0.0
        %1106 = vmatpush1.msra.mxu0 0.0
        %1107 = vmatprep.subr.mxu0 0.0
        %1108 = vmatpush1.msra.mxu0 0.0
        %1109 = vmatprep.subr.mxu0 0.0
        %1110 = vmatpush1.msra.mxu0 0.0
        %1111 = vmatprep.subr.mxu0 0.0
        %1112 = vmatpush1.msra.mxu0 0.0
        %1113 = vmatprep.subr.mxu0 0.0
        %1114 = vmatpush1.msra.mxu0 0.0
        %1115 = vmatprep.subr.mxu0 0.0
        %1116 = vmatpush1.msra.mxu0 0.0
        %1117 = vmatprep.subr.mxu0 0.0
        %1118 = vmatpush1.msra.mxu0 0.0
        %1119 = vmatprep.subr.mxu0 0.0
        %1120 = vmatpush1.msra.mxu0 0.0
        %1121 = vmatprep.subr.mxu0 0.0
        %1122 = vmatpush1.msra.mxu0 0.0
        %1123 = vmatprep.subr.mxu0 0.0
        %1124 = vmatpush1.msra.mxu0 0.0
        %1125 = vmatprep.subr.mxu0 0.0
        %1126 = vmatpush1.msra.mxu0 0.0
        %1127 = vmatprep.subr.mxu0 0.0
        %1128 = vmatpush1.msra.mxu0 0.0
        %1129 = vmatprep.subr.mxu0 0.0
        %1130 = vmatpush1.msra.mxu0 0.0
        %1131 = vmatprep.subr.mxu0 0.0
        %1132 = vmatpush1.msra.mxu0 0.0
        %1133 = vmatprep.subr.mxu0 0.0
        %1134 = vmatpush1.msra.mxu0 0.0
        %1135 = vmatprep.subr.mxu0 0.0
        %1136 = vmatpush1.msra.mxu0 0.0
        %1137 = vmatprep.subr.mxu0 0.0
        %1138 = vmatpush1.msra.mxu0 0.0
        %1139 = vmatprep.subr.mxu0 0.0
        %1140 = vmatpush1.msra.mxu0 0.0
        %1141 = vmatprep.subr.mxu0 0.0
        %1142 = vmatpush1.msra.mxu0 0.0
        %1143 = vmatprep.mubr.f32.mxu0 0.0
        %1144 = vmatmul.mubr.f32.gmra.mrb[0].mxu0 %v1077
        %v1145 = vpop.f32.mrb[0].mxu0
        %v1146 = vadd.f32 0.0, %v1145
        %v1147 = vpop.f32.mrb[0].mxu0
        %1148 = vdwg.mxu0
        %v1149 = vadd.f32 %v1076, %v1146
        %v1150 = vxor.u32 %v1149, 2147483648
        %v1151 = vmul.f32 %v1150, 1.442695
        %v1152 = vpow.pop %v1151
        %v1153 = vadd.f32 %v1152, 1.0
        %v1154 = vrcp.pop %v1153
        %v1155 = vmul.f32 1.0, %v1154
        %v1156 = vtanh.pop %v1149
        %v1157 = vmul.f32 %v1155, %v1062
        %1159 = vrot.lane.b32.xlu0 %v1156, 64
        %v1160 = vpop.permute.xlu0 %1159
        %v1162 = vmul.f32 %v1155, %v1160
        %1164 = vrot.lane.b32.xlu0 %v1162, 32
        %v1165 = vpop.permute.xlu0 %1164
        %v1167 = vadd.f32 %v1157, %v1165
        %v1168 = vtanh.pop %v1167
        %1170 = vrot.lane.b32.xlu0 %v1168, 64
        %v1171 = vpop.permute.xlu0 %1170
        %v1173 = vmul.f32 %v1155, %v1171
        %1175 = vrot.lane.b32.xlu0 %v1173, 32
        %v1176 = vpop.permute.xlu0 %1175
        %s1178 = scalar_lea.vmem %s4, 40
        %1179 = vst.msk [vmem:[%s1178] sm:$0xff] %vm551, %v1176
        %s1180 = scalar_lea.vmem [#allocation2], 48
        %v1181 = vld [vmem:[%s1180] sm:$0xff]
        %v1182 = vsel %vm551, %v1176, 0
        %1184 = vmatprep.subr.mxu0 0.0
        %1185 = vmatpush1.msra.mxu0 %v546
        %1186 = vmatprep.subr.mxu0 0.0
        %1187 = vmatpush1.msra.mxu0 %v547
        %1188 = vmatprep.subr.mxu0 0.0
        %1189 = vmatpush1.msra.mxu0 %v548
        %1190 = vmatprep.subr.mxu0 0.0
        %1191 = vmatpush1.msra.mxu0 %v549
        %1192 = vmatprep.subr.mxu0 0.0
        %1193 = vmatpush1.msra.mxu0 0.0
        %1194 = vmatprep.subr.mxu0 0.0
        %1195 = vmatpush1.msra.mxu0 0.0
        %1196 = vmatprep.subr.mxu0 0.0
        %1197 = vmatpush1.msra.mxu0 0.0
        %1198 = vmatprep.subr.mxu0 0.0
        %1199 = vmatpush1.msra.mxu0 0.0
        %1200 = vmatprep.subr.mxu0 0.0
        %1201 = vmatpush1.msra.mxu0 0.0
        %1202 = vmatprep.subr.mxu0 0.0
        %1203 = vmatpush1.msra.mxu0 0.0
        %1204 = vmatprep.subr.mxu0 0.0
        %1205 = vmatpush1.msra.mxu0 0.0
        %1206 = vmatprep.subr.mxu0 0.0
        %1207 = vmatpush1.msra.mxu0 0.0
        %1208 = vmatprep.subr.mxu0 0.0
        %1209 = vmatpush1.msra.mxu0 0.0
        %1210 = vmatprep.subr.mxu0 0.0
        %1211 = vmatpush1.msra.mxu0 0.0
        %1212 = vmatprep.subr.mxu0 0.0
        %1213 = vmatpush1.msra.mxu0 0.0
        %1214 = vmatprep.subr.mxu0 0.0
        %1215 = vmatpush1.msra.mxu0 0.0
        %1216 = vmatprep.subr.mxu0 0.0
        %1217 = vmatpush1.msra.mxu0 0.0
        %1218 = vmatprep.subr.mxu0 0.0
        %1219 = vmatpush1.msra.mxu0 0.0
        %1220 = vmatprep.subr.mxu0 0.0
        %1221 = vmatpush1.msra.mxu0 0.0
        %1222 = vmatprep.subr.mxu0 0.0
        %1223 = vmatpush1.msra.mxu0 0.0
        %1224 = vmatprep.subr.mxu0 0.0
        %1225 = vmatpush1.msra.mxu0 0.0
        %1226 = vmatprep.subr.mxu0 0.0
        %1227 = vmatpush1.msra.mxu0 0.0
        %1228 = vmatprep.subr.mxu0 0.0
        %1229 = vmatpush1.msra.mxu0 0.0
        %1230 = vmatprep.subr.mxu0 0.0
        %1231 = vmatpush1.msra.mxu0 0.0
        %1232 = vmatprep.subr.mxu0 0.0
        %1233 = vmatpush1.msra.mxu0 0.0
        %1234 = vmatprep.subr.mxu0 0.0
        %1235 = vmatpush1.msra.mxu0 0.0
        %1236 = vmatprep.subr.mxu0 0.0
        %1237 = vmatpush1.msra.mxu0 0.0
        %1238 = vmatprep.subr.mxu0 0.0
        %1239 = vmatpush1.msra.mxu0 0.0
        %1240 = vmatprep.subr.mxu0 0.0
        %1241 = vmatpush1.msra.mxu0 0.0
        %1242 = vmatprep.subr.mxu0 0.0
        %1243 = vmatpush1.msra.mxu0 0.0
        %1244 = vmatprep.subr.mxu0 0.0
        %1245 = vmatpush1.msra.mxu0 0.0
        %1246 = vmatprep.subr.mxu0 0.0
        %1247 = vmatpush1.msra.mxu0 0.0
        %1248 = vmatprep.mubr.f32.mxu0 0.0
        %1249 = vmatmul.mubr.f32.gmra.mrb[0].mxu0 %v1182
        %v1250 = vpop.f32.mrb[0].mxu0
        %v1251 = vadd.f32 0.0, %v1250
        %v1252 = vpop.f32.mrb[0].mxu0
        %1253 = vdwg.mxu0
        %v1254 = vadd.f32 %v1181, %v1251
        %v1255 = vxor.u32 %v1254, 2147483648
        %v1256 = vmul.f32 %v1255, 1.442695
        %v1257 = vpow.pop %v1256
        %v1258 = vadd.f32 %v1257, 1.0
        %v1259 = vrcp.pop %v1258
        %v1260 = vmul.f32 1.0, %v1259
        %v1261 = vtanh.pop %v1254
        %v1262 = vmul.f32 %v1260, %v1167
        %1264 = vrot.lane.b32.xlu0 %v1261, 64
        %v1265 = vpop.permute.xlu0 %1264
        %v1267 = vmul.f32 %v1260, %v1265
        %1269 = vrot.lane.b32.xlu0 %v1267, 32
        %v1270 = vpop.permute.xlu0 %1269
        %v1272 = vadd.f32 %v1262, %v1270
        %v1273 = vtanh.pop %v1272
        %1275 = vrot.lane.b32.xlu0 %v1273, 64
        %v1276 = vpop.permute.xlu0 %1275
        %v1278 = vmul.f32 %v1260, %v1276
        %1280 = vrot.lane.b32.xlu0 %v1278, 32
        %v1281 = vpop.permute.xlu0 %1280
        %s1283 = scalar_lea.vmem %s4, 48
        %1284 = vst.msk [vmem:[%s1283] sm:$0xff] %vm551, %v1281
        %s1285 = scalar_lea.vmem [#allocation2], 56
        %v1286 = vld [vmem:[%s1285] sm:$0xff]
        %v1287 = vsel %vm551, %v1281, 0
        %1289 = vmatprep.subr.mxu0 0.0
        %1290 = vmatpush1.msra.mxu0 %v546
        %1291 = vmatprep.subr.mxu0 0.0
        %1292 = vmatpush1.msra.mxu0 %v547
        %1293 = vmatprep.subr.mxu0 0.0
        %1294 = vmatpush1.msra.mxu0 %v548
        %1295 = vmatprep.subr.mxu0 0.0
        %1296 = vmatpush1.msra.mxu0 %v549
        %1297 = vmatprep.subr.mxu0 0.0
        %1298 = vmatpush1.msra.mxu0 0.0
        %1299 = vmatprep.subr.mxu0 0.0
        %1300 = vmatpush1.msra.mxu0 0.0
        %1301 = vmatprep.subr.mxu0 0.0
        %1302 = vmatpush1.msra.mxu0 0.0
        %1303 = vmatprep.subr.mxu0 0.0
        %1304 = vmatpush1.msra.mxu0 0.0
        %1305 = vmatprep.subr.mxu0 0.0
        %1306 = vmatpush1.msra.mxu0 0.0
        %1307 = vmatprep.subr.mxu0 0.0
        %1308 = vmatpush1.msra.mxu0 0.0
        %1309 = vmatprep.subr.mxu0 0.0
        %1310 = vmatpush1.msra.mxu0 0.0
        %1311 = vmatprep.subr.mxu0 0.0
        %1312 = vmatpush1.msra.mxu0 0.0
        %1313 = vmatprep.subr.mxu0 0.0
        %1314 = vmatpush1.msra.mxu0 0.0
        %1315 = vmatprep.subr.mxu0 0.0
        %1316 = vmatpush1.msra.mxu0 0.0
        %1317 = vmatprep.subr.mxu0 0.0
        %1318 = vmatpush1.msra.mxu0 0.0
        %1319 = vmatprep.subr.mxu0 0.0
        %1320 = vmatpush1.msra.mxu0 0.0
        %1321 = vmatprep.subr.mxu0 0.0
        %1322 = vmatpush1.msra.mxu0 0.0
        %1323 = vmatprep.subr.mxu0 0.0
        %1324 = vmatpush1.msra.mxu0 0.0
        %1325 = vmatprep.subr.mxu0 0.0
        %1326 = vmatpush1.msra.mxu0 0.0
        %1327 = vmatprep.subr.mxu0 0.0
        %1328 = vmatpush1.msra.mxu0 0.0
        %1329 = vmatprep.subr.mxu0 0.0
        %1330 = vmatpush1.msra.mxu0 0.0
        %1331 = vmatprep.subr.mxu0 0.0
        %1332 = vmatpush1.msra.mxu0 0.0
        %1333 = vmatprep.subr.mxu0 0.0
        %1334 = vmatpush1.msra.mxu0 0.0
        %1335 = vmatprep.subr.mxu0 0.0
        %1336 = vmatpush1.msra.mxu0 0.0
        %1337 = vmatprep.subr.mxu0 0.0
        %1338 = vmatpush1.msra.mxu0 0.0
        %1339 = vmatprep.subr.mxu0 0.0
        %1340 = vmatpush1.msra.mxu0 0.0
        %1341 = vmatprep.subr.mxu0 0.0
        %1342 = vmatpush1.msra.mxu0 0.0
        %1343 = vmatprep.subr.mxu0 0.0
        %1344 = vmatpush1.msra.mxu0 0.0
        %1345 = vmatprep.subr.mxu0 0.0
        %1346 = vmatpush1.msra.mxu0 0.0
        %1347 = vmatprep.subr.mxu0 0.0
        %1348 = vmatpush1.msra.mxu0 0.0
        %1349 = vmatprep.subr.mxu0 0.0
        %1350 = vmatpush1.msra.mxu0 0.0
        %1351 = vmatprep.subr.mxu0 0.0
        %1352 = vmatpush1.msra.mxu0 0.0
        %1353 = vmatprep.mubr.f32.mxu0 0.0
        %1354 = vmatmul.mubr.f32.gmra.mrb[0].mxu0 %v1287
        %v1355 = vpop.f32.mrb[0].mxu0
        %v1356 = vadd.f32 0.0, %v1355
        %v1357 = vpop.f32.mrb[0].mxu0
        %1358 = vdwg.mxu0
        %v1359 = vadd.f32 %v1286, %v1356
        %v1360 = vxor.u32 %v1359, 2147483648
        %v1361 = vmul.f32 %v1360, 1.442695
        %v1362 = vpow.pop %v1361
        %v1363 = vadd.f32 %v1362, 1.0
        %v1364 = vrcp.pop %v1363
        %v1365 = vmul.f32 1.0, %v1364
        %v1366 = vtanh.pop %v1359
        %v1367 = vmul.f32 %v1365, %v1272
        %1369 = vrot.lane.b32.xlu0 %v1366, 64
        %v1370 = vpop.permute.xlu0 %1369
        %v1372 = vmul.f32 %v1365, %v1370
        %1374 = vrot.lane.b32.xlu0 %v1372, 32
        %v1375 = vpop.permute.xlu0 %1374
        %v1377 = vadd.f32 %v1367, %v1375
        %v1378 = vtanh.pop %v1377
        %1380 = vrot.lane.b32.xlu0 %v1378, 64
        %v1381 = vpop.permute.xlu0 %1380
        %v1383 = vmul.f32 %v1365, %v1381
        %1385 = vrot.lane.b32.xlu0 %v1383, 32
        %v1386 = vpop.permute.xlu0 %1385
        %s1388 = scalar_lea.vmem %s4, 56
        %1389 = vst.msk [vmem:[%s1388] sm:$0xff] %vm551, %v1386
        // Predicated region
        $region49: #{_lambda_.1} parent=35 // pred_check
          %p1390 = pneg %p130
        $region50: #{_lambda_.1} parent=35 // pred_check_branch
          %1392 = sbr.rel (%p1390) target = $region52
        $region51: #{_lambda_.1} parent=35 // pred_region
          _
        $region52: #{_lambda_.1} parent=35 // pred_fallthru
          _
        // Predicated region
        $region53: #{_lambda_.1} parent=35 // pred_check
          %p1393 = pneg %p130
        $region54: #{_lambda_.1} parent=35 // pred_check_branch
          %1395 = sbr.rel (%p1393) target = $region56
        $region55: #{_lambda_.1} parent=35 // pred_region
          _
        $region56: #{_lambda_.1} parent=35 // pred_fallthru
          _
      $region36: #{_lambda_.1} parent=5 // pred_fallthru
        _
      %p1396 = scmp.le.s32.totalorder 2, %s13
      // Predicated region
      $region57: #{_lambda_.1} parent=5 // pred_check
        %p1397 = pneg %p1396
      $region58: #{_lambda_.1} parent=5 // pred_check_branch
        %1399 = sbr.rel (%p1397) target = $region60
      $region59: #{_lambda_.1} parent=5 // pred_region
        %s1400 = ssub.s32 %s13, 2
      $region60: #{_lambda_.1} parent=5 // pred_fallthru
        _
    $region6: #{_lambda_.1} parent=1 // loop_footer
      %s17 = sadd.s32 1, %s13
    $region7: #{_lambda_.1} parent=1 // loop_footer_branch
      %12 = sbr.rel target = $region3
    $region8: #{_lambda_.1} parent=1 // loop_exit
      _
    %1401 = vsyncpa [#allocation4], 1
    %s1402 = scalar_lea.sflag [#allocation4], 1
    %1403 = vsyncpa %s1402, 1

</llo_original>
